<compile_context>
chip_gen: v7x
topology: tpu7x:2x2x1
jax: 0.10.0
libtpu: 0.0.40
codegen_flags: <defaults>
</compile_context>

<pallas_src>
import jax
import jax.numpy as jnp
from jax.experimental import pallas as pl
from jax.experimental.pallas import tpu as pltpu


def _desdown_kernel(xp_ref, w13_ref, b13_ref, w2_ref, b2_ref, out_ref,
                    pad0, pad2):
    # xp_ref : (1, 4, H*W, Cin) bf16   pooling-window-major input
    # w13_ref: (9*Cin, 2*Cout)  bf16   conv1|conv3 im2col weights (BN folded)
    # b13_ref: (1, 2*Cout)      f32    conv1|conv3 bias (BN folded)
    # w2_ref : (9*Cout, Cout)   bf16   conv2 im2col weights (BN folded)
    # b2_ref : (1, Cout)        f32
    # out_ref: (1, H*W, Cout)   f32
    # pad0   : (H+2, W+2, Cin)  bf16 scratch (zero-padded pooled input)
    # pad2   : (H+2, W+2, Cout) bf16 scratch (zero-padded x2)
    H = pad0.shape[0] - 2
    W = pad0.shape[1] - 2
    Cin = pad0.shape[2]
    Cout = out_ref.shape[2]
    HW = H * W

    # ---- zero the 1-pixel halo ONCE.  Scratch persists across the sequential
    # ("arbitrary") grid; the interior is fully overwritten every step and the
    # halo is never written afterwards, so this is safe. ----
    @pl.when(pl.program_id(0) == 0)
    def _init_halo():
        for buf, C in ((pad0, Cin), (pad2, Cout)):
            buf[0:1, :, :] = jnp.zeros((1, W + 2, C), buf.dtype)
            buf[H + 1:H + 2, :, :] = jnp.zeros((1, W + 2, C), buf.dtype)
            buf[1:H + 1, 0:1, :] = jnp.zeros((H, 1, C), buf.dtype)
            buf[1:H + 1, W + 1:W + 2, :] = jnp.zeros((H, 1, C), buf.dtype)

    # ---- MaxPool2d(2): reduce over the leading 4-element pooling-window axis ----
    pooled = jnp.max(xp_ref[0], axis=0)                      # (H*W, Cin) bf16
    pad0[1:H + 1, 1:W + 1, :] = pooled.reshape(H, W, Cin)

    def im2col(buf, C):
        # Build the (HW, 9*C) bf16 slab once; the strided-slice relayouts are
        # paid once per conv instead of once per tap GEMM.
        cols = []
        for tap in range(9):
            dy, dx = tap // 3, tap % 3
            cols.append(buf[dy:dy + H, dx:dx + W, :].reshape(HW, C))
        return jnp.concatenate(cols, axis=-1)

    # ---- fused conv1+conv3: single im2col GEMM (K = 9*Cin), f32 accumulation ----
    y13 = jnp.dot(im2col(pad0, Cin), w13_ref[...],
                  preferred_element_type=jnp.float32) + b13_ref[...]
    y1 = y13[:, :Cout]                                       # BN1(Conv1(x))
    y3 = y13[:, Cout:]                                       # BN3(Conv3(x))
    x2 = jnp.maximum(y3 + y1, 0.0)                           # f32, stays live
    pad2[1:H + 1, 1:W + 1, :] = x2.astype(pad2.dtype).reshape(H, W, Cout)

    # ---- conv2 on x2: single im2col GEMM (K = 9*Cout) ----
    y2 = jnp.dot(im2col(pad2, Cout), w2_ref[...],
                 preferred_element_type=jnp.float32) + b2_ref[...]

    # ---- out = relu(y3 + x2 + y2): live f32 values, single store per step ----
    out_ref[0] = jnp.maximum(y3 + x2 + y2, 0.0).astype(out_ref.dtype)


def _vmem_limit_bytes(H, W, Cin, Cout):
    """Scoped-VMEM budget computed from actual block / scratch / temp sizes."""
    HW = H * W
    blocks = 2 * (4 * HW * Cin * 2            # xp block (bf16), double-buffered
                  + 9 * Cin * 2 * Cout * 2    # w13 (bf16)
                  + 2 * Cout * 4              # b13
                  + 9 * Cout * Cout * 2       # w2 (bf16)
                  + Cout * 4                  # b2
                  + HW * Cout * 4)            # out block
    scratch = (H + 2) * (W + 2) * (Cin + Cout) * 2            # pad0 + pad2 (bf16)
    temps = HW * (9 * Cin * 2 + 9 * Cout * 2                  # im2col slabs
                  + 2 * Cout * 4 + 4 * Cout * 4)              # y13/y1/y3/x2/y2
    need = blocks + scratch + temps
    # 2x headroom for Mosaic-internal relayout temporaries; clamp so the limit
    # is valid on every generation (v7x has 64 MiB physical VMEM per core).
    return int(min(64 * 1024 * 1024, max(4 * 1024 * 1024, 2 * need)))


def des_down(x_nchw, params):
    """DesDown forward. x_nchw: (N, Cin, H2, W2) f32 -> (N, Cout, H2/2, W2/2)."""
    w1, b1, w2, b2, w3, b3 = params
    N, Cin, H2, W2 = x_nchw.shape
    assert H2 % 2 == 0 and W2 % 2 == 0, "DesDown requires even spatial dims"
    H, W = H2 // 2, W2 // 2
    Cout = w2.shape[-1]
    HW = H * W

    # glue: NCHW -> pooling-window-major (N, 4, HW, Cin), staged in bf16 so the
    # largest HBM DMA (and its double buffer) is half-size.
    # TODO(synk): at large Cin this lane-sparse repack is itself an HBM round
    # trip; move the 2x2 split/max into the kernel (VMEM-local) if it profiles hot.
    x = jnp.transpose(x_nchw.astype(jnp.bfloat16), (0, 2, 3, 1))
    xp = x.reshape(N, H, 2, W, 2, Cin).transpose(0, 2, 4, 1, 3, 5)
    xp = xp.reshape(N, 4, HW, Cin)

    # im2col weight layout; conv1/conv3 share their input so fuse along Cout.
    # Weights go to bf16 for the MXU; biases / elementwise math stay f32.
    w13 = jnp.concatenate([w1, w3], axis=-1).astype(jnp.bfloat16)
    w13 = w13.reshape(9 * Cin, 2 * Cout)                           # (9*Cin, 2*Cout)
    b13 = jnp.concatenate([b1, b3], axis=-1)                       # (1, 2*Cout)
    w2k = w2.astype(jnp.bfloat16).reshape(9 * Cout, Cout)          # (9*Cout, Cout)

    out = pl.pallas_call(
        _desdown_kernel,
        out_shape=jax.ShapeDtypeStruct((N, HW, Cout), jnp.float32),
        grid_spec=pltpu.PrefetchScalarGridSpec(
            num_scalar_prefetch=0,
            grid=(N,),
            in_specs=[
                pl.BlockSpec((1, 4, HW, Cin), lambda b: (b, 0, 0, 0)),
                pl.BlockSpec((9 * Cin, 2 * Cout), lambda b: (0, 0)),
                pl.BlockSpec((1, 2 * Cout), lambda b: (0, 0)),
                pl.BlockSpec((9 * Cout, Cout), lambda b: (0, 0)),
                pl.BlockSpec((1, Cout), lambda b: (0, 0)),
            ],
            out_specs=pl.BlockSpec((1, HW, Cout), lambda b: (b, 0, 0)),
            scratch_shapes=[
                pltpu.VMEM((H + 2, W + 2, Cin), jnp.bfloat16),   # padded pooled x
                pltpu.VMEM((H + 2, W + 2, Cout), jnp.bfloat16),  # padded x2
            ],
        ),
        compiler_params=pltpu.CompilerParams(
            # "arbitrary": the once-only halo init relies on the grid running
            # sequentially on one core with persistent scratch.  On single-TC
            # v5e/v6e parallel-vs-arbitrary is measured-neutral; for megacore
            # parts re-enable per-step (or per-core) halo init before marking
            # this axis parallel.
            dimension_semantics=("arbitrary",),
            vmem_limit_bytes=_vmem_limit_bytes(H, W, Cin, Cout)),
    )(xp, w13, b13, w2k, b2)

    # glue: (N, H*W, Cout) -> NCHW to match the PyTorch module's convention.
    out = out.reshape(N, H, W, Cout)
    return jnp.transpose(out, (0, 3, 1, 2))


def init_params(key, in_channels, out_channels, eps=1e-5):
    """Deterministic synthetic Conv+BN parameters, with BN (eval) folded into conv."""
    mid = out_channels  # DesDoubleConv default: mid_channels = out_channels

    def conv_bn(k, cin, cout):
        kw, kb, kg, kbeta, kmu, kvar = jax.random.split(k, 6)
        fan_in = cin * 9
        w = jax.random.normal(kw, (3, 3, cin, cout), jnp.float32) / jnp.sqrt(fan_in)
        b = 0.1 * jax.random.normal(kb, (cout,), jnp.float32)
        gamma = 1.0 + 0.1 * jax.random.normal(kg, (cout,), jnp.float32)
        beta = 0.1 * jax.random.normal(kbeta, (cout,), jnp.float32)
        mu = 0.1 * jax.random.normal(kmu, (cout,), jnp.float32)
        var = jax.random.uniform(kvar, (cout,), jnp.float32, minval=0.5, maxval=1.5)
        s = gamma / jnp.sqrt(var + eps)
        w_f = w * s                       # fold BN scale into conv weight
        b_f = (b - mu) * s + beta         # fold BN shift into conv bias
        return w_f.reshape(9, cin, cout), b_f.reshape(1, cout)

    k1, k2, k3 = jax.random.split(key, 3)
    w1, b1 = conv_bn(k1, in_channels, mid)            # Conv1 + BN1
    w2, b2 = conv_bn(k2, mid, out_channels)           # Conv2 + BN2
    w3, b3 = conv_bn(k3, in_channels, out_channels)   # Conv3 + BN3
    return (w1, b1, w2, b2, w3, b3)


def reference(x_nchw, params, matmul_dtype=jnp.bfloat16):
    """Pure-JAX reference of the same (BN-folded, eval-mode) forward.

    `matmul_dtype=jnp.bfloat16` mirrors the kernel's MXU precision (bf16
    operands, f32 accumulation); all elementwise math is f32, like the kernel.
    """
    w1, b1, w2, b2, w3, b3 = params

    def conv(x, w9, b):
        cin, cout = w9.shape[1], w9.shape[2]
        w = w9.reshape(3, 3, cin, cout)
        y = jax.lax.conv_general_dilated(
            x.astype(matmul_dtype), w.astype(matmul_dtype), (1, 1), 'SAME',
            dimension_numbers=('NHWC', 'HWIO', 'NHWC'),
            preferred_element_type=jnp.float32)
        return y + b.reshape(1, 1, 1, cout)

    x = jnp.transpose(x_nchw, (0, 2, 3, 1))
    N, H2, W2, C = x.shape
    xp = x.reshape(N, H2 // 2, 2, W2 // 2, 2, C).max(axis=(2, 4))
    y1 = conv(xp, w1, b1)
    y3 = conv(xp, w3, b3)
    x2 = jax.nn.relu(y3 + y1)
    y2 = conv(x2, w2, b2)
    out = jax.nn.relu(y3 + x2 + y2)
    return jnp.transpose(out, (0, 3, 1, 2))


if __name__ == "__main__":
    key = jax.random.PRNGKey(0)
    kx, kp = jax.random.split(key)

    N, Cin, Cout, S = 2, 4, 8, 16            # input NCHW: (2, 4, 16, 16)
    x = jax.random.normal(kx, (N, Cin, S, S), jnp.float32)
    params = init_params(kp, Cin, Cout)

    out = des_down(x, params)
    out = jax.block_until_ready(out)
    assert out.shape == (N, Cout, S // 2, S // 2)

    # Precision-matched reference (bf16 matmul operands, f32 accumulation).
    ref = reference(x, params, matmul_dtype=jnp.bfloat16)
    max_err = float(jnp.max(jnp.abs(out - ref)))
    assert jnp.allclose(out, ref, rtol=2e-2, atol=2e-2), max_err

    print("KERNEL_OK")
</pallas_src>

<mosaic_0001>
module attributes {stable_mosaic.version = 11 : i64} {
  func.func @_desdown_kernel(%arg0: i32, %arg1: memref<1x4x64x4xbf16, #tpu.memory_space<vmem>>, %arg2: memref<36x16xbf16, #tpu.memory_space<vmem>>, %arg3: memref<1x16xf32, #tpu.memory_space<vmem>>, %arg4: memref<72x8xbf16, #tpu.memory_space<vmem>>, %arg5: memref<1x8xf32, #tpu.memory_space<vmem>>, %arg6: memref<1x64x8xf32, #tpu.memory_space<vmem>>, %arg7: memref<10x10x4xbf16, #tpu.memory_space<vmem>>, %arg8: memref<10x10x8xbf16, #tpu.memory_space<vmem>>) attributes {dimension_semantics = [#tpu.dimension_semantics<arbitrary>], iteration_bounds = array<i64: 2>, scalar_prefetch = 0 : i64, scratch_operands = 2 : i64, tpu.core_type = #tpu.core_type<tc>, window_params = [{transform_indices = @transform_0, window_bounds = array<i64: 1, 4, 64, 4>}, {pipeline_mode = #tpu.pipeline_mode<synchronous>, transform_indices = @transform_1, window_bounds = array<i64: 36, 16>}, {pipeline_mode = #tpu.pipeline_mode<synchronous>, transform_indices = @transform_2, window_bounds = array<i64: 1, 16>}, {pipeline_mode = #tpu.pipeline_mode<synchronous>, transform_indices = @transform_3, window_bounds = array<i64: 72, 8>}, {pipeline_mode = #tpu.pipeline_mode<synchronous>, transform_indices = @transform_4, window_bounds = array<i64: 1, 8>}, {transform_indices = @transform_5, window_bounds = array<i64: 1, 64, 8>}]} {
    %c0_i32 = arith.constant 0 : i32
    %0 = arith.cmpi eq, %arg0, %c0_i32 : i32
    %1 = arith.extui %0 : i1 to i32
    %c0_i32_0 = arith.constant 0 : i32
    %2 = arith.cmpi ne, %1, %c0_i32_0 : i32
    scf.if %2 {
      %cst_77 = arith.constant 0.000000e+00 : bf16
      %71 = vector.broadcast %cst_77 : bf16 to vector<1x10x4xbf16>
      %c0_78 = arith.constant 0 : index
      %c0_79 = arith.constant 0 : index
      %c0_80 = arith.constant 0 : index
      %72 = vector.load %arg7[%c0_78, %c0_79, %c0_80] : memref<10x10x4xbf16, #tpu.memory_space<vmem>>, vector<1x10x4xbf16>
      tpu.vector_store %arg7[%c0_78, %c0_79, %c0_80], %71 {strides = array<i32>} : memref<10x10x4xbf16, #tpu.memory_space<vmem>>, vector<1x10x4xbf16>,
      %cst_81 = arith.constant 0.000000e+00 : bf16
      %73 = vector.broadcast %cst_81 : bf16 to vector<1x10x4xbf16>
      %c9 = arith.constant 9 : index
      %c0_82 = arith.constant 0 : index
      %c0_83 = arith.constant 0 : index
      %74 = vector.load %arg7[%c9, %c0_82, %c0_83] : memref<10x10x4xbf16, #tpu.memory_space<vmem>>, vector<1x10x4xbf16>
      tpu.vector_store %arg7[%c9, %c0_82, %c0_83], %73 {strides = array<i32>} : memref<10x10x4xbf16, #tpu.memory_space<vmem>>, vector<1x10x4xbf16>,
      %cst_84 = arith.constant 0.000000e+00 : bf16
      %75 = vector.broadcast %cst_84 : bf16 to vector<8x1x4xbf16>
      %c1_85 = arith.constant 1 : index
      %c0_86 = arith.constant 0 : index
      %c0_87 = arith.constant 0 : index
      %76 = vector.load %arg7[%c1_85, %c0_86, %c0_87] : memref<10x10x4xbf16, #tpu.memory_space<vmem>>, vector<8x1x4xbf16>
      tpu.vector_store %arg7[%c1_85, %c0_86, %c0_87], %75 {strides = array<i32>} : memref<10x10x4xbf16, #tpu.memory_space<vmem>>, vector<8x1x4xbf16>,
      %cst_88 = arith.constant 0.000000e+00 : bf16
      %77 = vector.broadcast %cst_88 : bf16 to vector<8x1x4xbf16>
      %c1_89 = arith.constant 1 : index
      %c9_90 = arith.constant 9 : index
      %c0_91 = arith.constant 0 : index
      %78 = vector.load %arg7[%c1_89, %c9_90, %c0_91] : memref<10x10x4xbf16, #tpu.memory_space<vmem>>, vector<8x1x4xbf16>
      tpu.vector_store %arg7[%c1_89, %c9_90, %c0_91], %77 {strides = array<i32>} : memref<10x10x4xbf16, #tpu.memory_space<vmem>>, vector<8x1x4xbf16>,
      %cst_92 = arith.constant 0.000000e+00 : bf16
      %79 = vector.broadcast %cst_92 : bf16 to vector<1x10x8xbf16>
      %c0_93 = arith.constant 0 : index
      %c0_94 = arith.constant 0 : index
      %c0_95 = arith.constant 0 : index
      %80 = vector.load %arg8[%c0_93, %c0_94, %c0_95] : memref<10x10x8xbf16, #tpu.memory_space<vmem>>, vector<1x10x8xbf16>
      tpu.vector_store %arg8[%c0_93, %c0_94, %c0_95], %79 {strides = array<i32>} : memref<10x10x8xbf16, #tpu.memory_space<vmem>>, vector<1x10x8xbf16>,
      %cst_96 = arith.constant 0.000000e+00 : bf16
      %81 = vector.broadcast %cst_96 : bf16 to vector<1x10x8xbf16>
      %c9_97 = arith.constant 9 : index
      %c0_98 = arith.constant 0 : index
      %c0_99 = arith.constant 0 : index
      %82 = vector.load %arg8[%c9_97, %c0_98, %c0_99] : memref<10x10x8xbf16, #tpu.memory_space<vmem>>, vector<1x10x8xbf16>
      tpu.vector_store %arg8[%c9_97, %c0_98, %c0_99], %81 {strides = array<i32>} : memref<10x10x8xbf16, #tpu.memory_space<vmem>>, vector<1x10x8xbf16>,
      %cst_100 = arith.constant 0.000000e+00 : bf16
      %83 = vector.broadcast %cst_100 : bf16 to vector<8x1x8xbf16>
      %c1_101 = arith.constant 1 : index
      %c0_102 = arith.constant 0 : index
      %c0_103 = arith.constant 0 : index
      %84 = vector.load %arg8[%c1_101, %c0_102, %c0_103] : memref<10x10x8xbf16, #tpu.memory_space<vmem>>, vector<8x1x8xbf16>
      tpu.vector_store %arg8[%c1_101, %c0_102, %c0_103], %83 {strides = array<i32>} : memref<10x10x8xbf16, #tpu.memory_space<vmem>>, vector<8x1x8xbf16>,
      %cst_104 = arith.constant 0.000000e+00 : bf16
      %85 = vector.broadcast %cst_104 : bf16 to vector<8x1x8xbf16>
      %c1_105 = arith.constant 1 : index
      %c9_106 = arith.constant 9 : index
      %c0_107 = arith.constant 0 : index
      %86 = vector.load %arg8[%c1_105, %c9_106, %c0_107] : memref<10x10x8xbf16, #tpu.memory_space<vmem>>, vector<8x1x8xbf16>
      tpu.vector_store %arg8[%c1_105, %c9_106, %c0_107], %85 {strides = array<i32>} : memref<10x10x8xbf16, #tpu.memory_space<vmem>>, vector<8x1x8xbf16>,
    } else {
    }
    %c0 = arith.constant 0 : index
    %c0_1 = arith.constant 0 : index
    %c0_2 = arith.constant 0 : index
    %c0_3 = arith.constant 0 : index
    %3 = vector.load %arg1[%c0, %c0_1, %c0_2, %c0_3] : memref<1x4x64x4xbf16, #tpu.memory_space<vmem>>, vector<1x4x64x4xbf16>
    %4 = vector.shape_cast %3 : vector<1x4x64x4xbf16> to vector<4x64x4xbf16>
    %cst = arith.constant dense<0xFF80> : vector<64x4xbf16>
    %5 = vector.multi_reduction <maximumf>, %4, %cst [0] : vector<4x64x4xbf16> to vector<64x4xbf16>
    %6 = vector.shape_cast %5 : vector<64x4xbf16> to vector<8x8x4xbf16>
    %c1 = arith.constant 1 : index
    %c1_4 = arith.constant 1 : index
    %c0_5 = arith.constant 0 : index
    %7 = vector.load %arg7[%c1, %c1_4, %c0_5] : memref<10x10x4xbf16, #tpu.memory_space<vmem>>, vector<8x8x4xbf16>
    tpu.vector_store %arg7[%c1, %c1_4, %c0_5], %6 {strides = array<i32>} : memref<10x10x4xbf16, #tpu.memory_space<vmem>>, vector<8x8x4xbf16>,
    %c0_6 = arith.constant 0 : index
    %c0_7 = arith.constant 0 : index
    %c0_8 = arith.constant 0 : index
    %8 = vector.load %arg7[%c0_6, %c0_7, %c0_8] : memref<10x10x4xbf16, #tpu.memory_space<vmem>>, vector<8x8x4xbf16>
    %9 = vector.shape_cast %8 : vector<8x8x4xbf16> to vector<64x4xbf16>
    %c0_9 = arith.constant 0 : index
    %c1_10 = arith.constant 1 : index
    %c0_11 = arith.constant 0 : index
    %10 = vector.load %arg7[%c0_9, %c1_10, %c0_11] : memref<10x10x4xbf16, #tpu.memory_space<vmem>>, vector<8x8x4xbf16>
    %11 = vector.shape_cast %10 : vector<8x8x4xbf16> to vector<64x4xbf16>
    %c0_12 = arith.constant 0 : index
    %c2 = arith.constant 2 : index
    %c0_13 = arith.constant 0 : index
    %12 = vector.load %arg7[%c0_12, %c2, %c0_13] : memref<10x10x4xbf16, #tpu.memory_space<vmem>>, vector<8x8x4xbf16>
    %13 = vector.shape_cast %12 : vector<8x8x4xbf16> to vector<64x4xbf16>
    %c1_14 = arith.constant 1 : index
    %c0_15 = arith.constant 0 : index
    %c0_16 = arith.constant 0 : index
    %14 = vector.load %arg7[%c1_14, %c0_15, %c0_16] : memref<10x10x4xbf16, #tpu.memory_space<vmem>>, vector<8x8x4xbf16>
    %15 = vector.shape_cast %14 : vector<8x8x4xbf16> to vector<64x4xbf16>
    %c1_17 = arith.constant 1 : index
    %c1_18 = arith.constant 1 : index
    %c0_19 = arith.constant 0 : index
    %16 = vector.load %arg7[%c1_17, %c1_18, %c0_19] : memref<10x10x4xbf16, #tpu.memory_space<vmem>>, vector<8x8x4xbf16>
    %17 = vector.shape_cast %16 : vector<8x8x4xbf16> to vector<64x4xbf16>
    %c1_20 = arith.constant 1 : index
    %c2_21 = arith.constant 2 : index
    %c0_22 = arith.constant 0 : index
    %18 = vector.load %arg7[%c1_20, %c2_21, %c0_22] : memref<10x10x4xbf16, #tpu.memory_space<vmem>>, vector<8x8x4xbf16>
    %19 = vector.shape_cast %18 : vector<8x8x4xbf16> to vector<64x4xbf16>
    %c2_23 = arith.constant 2 : index
    %c0_24 = arith.constant 0 : index
    %c0_25 = arith.constant 0 : index
    %20 = vector.load %arg7[%c2_23, %c0_24, %c0_25] : memref<10x10x4xbf16, #tpu.memory_space<vmem>>, vector<8x8x4xbf16>
    %21 = vector.shape_cast %20 : vector<8x8x4xbf16> to vector<64x4xbf16>
    %c2_26 = arith.constant 2 : index
    %c1_27 = arith.constant 1 : index
    %c0_28 = arith.constant 0 : index
    %22 = vector.load %arg7[%c2_26, %c1_27, %c0_28] : memref<10x10x4xbf16, #tpu.memory_space<vmem>>, vector<8x8x4xbf16>
    %23 = vector.shape_cast %22 : vector<8x8x4xbf16> to vector<64x4xbf16>
    %c2_29 = arith.constant 2 : index
    %c2_30 = arith.constant 2 : index
    %c0_31 = arith.constant 0 : index
    %24 = vector.load %arg7[%c2_29, %c2_30, %c0_31] : memref<10x10x4xbf16, #tpu.memory_space<vmem>>, vector<8x8x4xbf16>
    %25 = vector.shape_cast %24 : vector<8x8x4xbf16> to vector<64x4xbf16>
    %26 = tpu.concatenate %9, %11, %13, %15, %17, %19, %21, %23, %25 in 1 : vector<64x4xbf16>, vector<64x4xbf16>, vector<64x4xbf16>, vector<64x4xbf16>, vector<64x4xbf16>, vector<64x4xbf16>, vector<64x4xbf16>, vector<64x4xbf16>, vector<64x4xbf16> -> vector<64x36xbf16>
    %c0_32 = arith.constant 0 : index
    %c0_33 = arith.constant 0 : index
    %27 = vector.load %arg2[%c0_32, %c0_33] : memref<36x16xbf16, #tpu.memory_space<vmem>>, vector<36x16xbf16>
    %cst_34 = arith.constant dense<0.000000e+00> : vector<64x16xf32>
    %28 = tpu.matmul %26, %27, %cst_34 {dimension_numbers = #tpu.dot_dimension_numbers<[1], [0], [0], [1], [0, 0, 1, 1], [], []>} : vector<64x36xbf16>, vector<36x16xbf16>, vector<64x16xf32> -> vector<64x16xf32>
    %c0_35 = arith.constant 0 : index
    %c0_36 = arith.constant 0 : index
    %29 = vector.load %arg3[%c0_35, %c0_36] : memref<1x16xf32, #tpu.memory_space<vmem>>, vector<1x16xf32>
    %30 = vector.broadcast %29 : vector<1x16xf32> to vector<64x16xf32>
    %31 = arith.addf %28, %30 : vector<64x16xf32>
    %32 = vector.extract_strided_slice %31 {offsets = [0, 0], sizes = [64, 8], strides = [1, 1]} : vector<64x16xf32> to vector<64x8xf32>
    %33 = vector.extract_strided_slice %31 {offsets = [0, 8], sizes = [64, 8], strides = [1, 1]} : vector<64x16xf32> to vector<64x8xf32>
    %34 = arith.addf %33, %32 : vector<64x8xf32>
    %cst_37 = arith.constant 0.000000e+00 : f32
    %35 = vector.broadcast %cst_37 : f32 to vector<64x8xf32>
    %36 = arith.maximumf %34, %35 : vector<64x8xf32>
    %37 = arith.truncf %36 : vector<64x8xf32> to vector<64x8xbf16>
    %38 = vector.shape_cast %37 : vector<64x8xbf16> to vector<8x8x8xbf16>
    %c1_38 = arith.constant 1 : index
    %c1_39 = arith.constant 1 : index
    %c0_40 = arith.constant 0 : index
    %39 = vector.load %arg8[%c1_38, %c1_39, %c0_40] : memref<10x10x8xbf16, #tpu.memory_space<vmem>>, vector<8x8x8xbf16>
    tpu.vector_store %arg8[%c1_38, %c1_39, %c0_40], %38 {strides = array<i32>} : memref<10x10x8xbf16, #tpu.memory_space<vmem>>, vector<8x8x8xbf16>,
    %c0_41 = arith.constant 0 : index
    %c0_42 = arith.constant 0 : index
    %c0_43 = arith.constant 0 : index
    %40 = vector.load %arg8[%c0_41, %c0_42, %c0_43] : memref<10x10x8xbf16, #tpu.memory_space<vmem>>, vector<8x8x8xbf16>
    %41 = vector.shape_cast %40 : vector<8x8x8xbf16> to vector<64x8xbf16>
    %c0_44 = arith.constant 0 : index
    %c1_45 = arith.constant 1 : index
    %c0_46 = arith.constant 0 : index
    %42 = vector.load %arg8[%c0_44, %c1_45, %c0_46] : memref<10x10x8xbf16, #tpu.memory_space<vmem>>, vector<8x8x8xbf16>
    %43 = vector.shape_cast %42 : vector<8x8x8xbf16> to vector<64x8xbf16>
    %c0_47 = arith.constant 0 : index
    %c2_48 = arith.constant 2 : index
    %c0_49 = arith.constant 0 : index
    %44 = vector.load %arg8[%c0_47, %c2_48, %c0_49] : memref<10x10x8xbf16, #tpu.memory_space<vmem>>, vector<8x8x8xbf16>
    %45 = vector.shape_cast %44 : vector<8x8x8xbf16> to vector<64x8xbf16>
    %c1_50 = arith.constant 1 : index
    %c0_51 = arith.constant 0 : index
    %c0_52 = arith.constant 0 : index
    %46 = vector.load %arg8[%c1_50, %c0_51, %c0_52] : memref<10x10x8xbf16, #tpu.memory_space<vmem>>, vector<8x8x8xbf16>
    %47 = vector.shape_cast %46 : vector<8x8x8xbf16> to vector<64x8xbf16>
    %c1_53 = arith.constant 1 : index
    %c1_54 = arith.constant 1 : index
    %c0_55 = arith.constant 0 : index
    %48 = vector.load %arg8[%c1_53, %c1_54, %c0_55] : memref<10x10x8xbf16, #tpu.memory_space<vmem>>, vector<8x8x8xbf16>
    %49 = vector.shape_cast %48 : vector<8x8x8xbf16> to vector<64x8xbf16>
    %c1_56 = arith.constant 1 : index
    %c2_57 = arith.constant 2 : index
    %c0_58 = arith.constant 0 : index
    %50 = vector.load %arg8[%c1_56, %c2_57, %c0_58] : memref<10x10x8xbf16, #tpu.memory_space<vmem>>, vector<8x8x8xbf16>
    %51 = vector.shape_cast %50 : vector<8x8x8xbf16> to vector<64x8xbf16>
    %c2_59 = arith.constant 2 : index
    %c0_60 = arith.constant 0 : index
    %c0_61 = arith.constant 0 : index
    %52 = vector.load %arg8[%c2_59, %c0_60, %c0_61] : memref<10x10x8xbf16, #tpu.memory_space<vmem>>, vector<8x8x8xbf16>
    %53 = vector.shape_cast %52 : vector<8x8x8xbf16> to vector<64x8xbf16>
    %c2_62 = arith.constant 2 : index
    %c1_63 = arith.constant 1 : index
    %c0_64 = arith.constant 0 : index
    %54 = vector.load %arg8[%c2_62, %c1_63, %c0_64] : memref<10x10x8xbf16, #tpu.memory_space<vmem>>, vector<8x8x8xbf16>
    %55 = vector.shape_cast %54 : vector<8x8x8xbf16> to vector<64x8xbf16>
    %c2_65 = arith.constant 2 : index
    %c2_66 = arith.constant 2 : index
    %c0_67 = arith.constant 0 : index
    %56 = vector.load %arg8[%c2_65, %c2_66, %c0_67] : memref<10x10x8xbf16, #tpu.memory_space<vmem>>, vector<8x8x8xbf16>
    %57 = vector.shape_cast %56 : vector<8x8x8xbf16> to vector<64x8xbf16>
    %58 = tpu.concatenate %41, %43, %45, %47, %49, %51, %53, %55, %57 in 1 : vector<64x8xbf16>, vector<64x8xbf16>, vector<64x8xbf16>, vector<64x8xbf16>, vector<64x8xbf16>, vector<64x8xbf16>, vector<64x8xbf16>, vector<64x8xbf16>, vector<64x8xbf16> -> vector<64x72xbf16>
    %c0_68 = arith.constant 0 : index
    %c0_69 = arith.constant 0 : index
    %59 = vector.load %arg4[%c0_68, %c0_69] : memref<72x8xbf16, #tpu.memory_space<vmem>>, vector<72x8xbf16>
    %cst_70 = arith.constant dense<0.000000e+00> : vector<64x8xf32>
    %60 = tpu.matmul %58, %59, %cst_70 {dimension_numbers = #tpu.dot_dimension_numbers<[1], [0], [0], [1], [0, 0, 1, 1], [], []>} : vector<64x72xbf16>, vector<72x8xbf16>, vector<64x8xf32> -> vector<64x8xf32>
    %c0_71 = arith.constant 0 : index
    %c0_72 = arith.constant 0 : index
    %61 = vector.load %arg5[%c0_71, %c0_72] : memref<1x8xf32, #tpu.memory_space<vmem>>, vector<1x8xf32>
    %62 = vector.broadcast %61 : vector<1x8xf32> to vector<64x8xf32>
    %63 = arith.addf %60, %62 : vector<64x8xf32>
    %64 = arith.addf %33, %36 : vector<64x8xf32>
    %65 = arith.addf %64, %63 : vector<64x8xf32>
    %cst_73 = arith.constant 0.000000e+00 : f32
    %66 = vector.broadcast %cst_73 : f32 to vector<64x8xf32>
    %67 = arith.maximumf %65, %66 : vector<64x8xf32>
    %c0_74 = arith.constant 0 : index
    %c0_75 = arith.constant 0 : index
    %c0_76 = arith.constant 0 : index
    %68 = vector.load %arg6[%c0_74, %c0_75, %c0_76] : memref<1x64x8xf32, #tpu.memory_space<vmem>>, vector<1x64x8xf32>
    %69 = vector.shape_cast %68 : vector<1x64x8xf32> to vector<64x8xf32>
    %70 = vector.shape_cast %67 : vector<64x8xf32> to vector<1x64x8xf32>
    tpu.vector_store %arg6[%c0_74, %c0_75, %c0_76], %70 {strides = array<i32>} : memref<1x64x8xf32, #tpu.memory_space<vmem>>, vector<1x64x8xf32>,
    return
  }
  func.func @transform_0(%arg0: i32) -> (i32, i32, i32, i32) {
    %c0_i32 = arith.constant 0 : i32
    %c0_i32_0 = arith.constant 0 : i32
    %c0_i32_1 = arith.constant 0 : i32
    %c0_i32_2 = arith.constant 0 : i32
    return %arg0, %c0_i32, %c0_i32_0, %c0_i32_1 : i32, i32, i32, i32
  }
  func.func @transform_1(%arg0: i32) -> (i32, i32) {
    %c0_i32 = arith.constant 0 : i32
    %c0_i32_0 = arith.constant 0 : i32
    %c0_i32_1 = arith.constant 0 : i32
    return %c0_i32, %c0_i32_0 : i32, i32
  }
  func.func @transform_2(%arg0: i32) -> (i32, i32) {
    %c0_i32 = arith.constant 0 : i32
    %c0_i32_0 = arith.constant 0 : i32
    %c0_i32_1 = arith.constant 0 : i32
    return %c0_i32, %c0_i32_0 : i32, i32
  }
  func.func @transform_3(%arg0: i32) -> (i32, i32) {
    %c0_i32 = arith.constant 0 : i32
    %c0_i32_0 = arith.constant 0 : i32
    %c0_i32_1 = arith.constant 0 : i32
    return %c0_i32, %c0_i32_0 : i32, i32
  }
  func.func @transform_4(%arg0: i32) -> (i32, i32) {
    %c0_i32 = arith.constant 0 : i32
    %c0_i32_0 = arith.constant 0 : i32
    %c0_i32_1 = arith.constant 0 : i32
    return %c0_i32, %c0_i32_0 : i32, i32
  }
  func.func @transform_5(%arg0: i32) -> (i32, i32, i32) {
    %c0_i32 = arith.constant 0 : i32
    %c0_i32_0 = arith.constant 0 : i32
    %c0_i32_1 = arith.constant 0 : i32
    return %arg0, %c0_i32, %c0_i32_0 : i32, i32, i32
  }
}

</mosaic_0001>

<llo_original>
// kernel: tpu_custom_call.1
$region0: #{tpu_custom_call.1}
  #allocation0 [shape = 'u32[]', space=smem, size = 0x4, offset = 0x4, fixed_abs, tag = 'smem constant byte address 0x4 - core index']
  #allocation1 [shape = 'u32[144,128]{1,0:T(1,128)}', space=vmem, size = 0x12000, scoped, tag = 'internal scratch']
  #allocation2 [shape = 'bf16[10,10,4]{2,1,0:T(8,128)(2,1)}', space=vmem, size = 0xa000, scoped, tag = 'scratch operand']
  #allocation3 [shape = 'bf16[10,10,8]{2,1,0:T(8,128)(2,1)}', space=vmem, size = 0xa000, scoped, tag = 'scratch operand']
  %s0 = inlined_call_operand.vmem [shape: bf16[2,4,64,4], index: 0, kind: input, shape index: {}]
  %s1 = inlined_call_operand.vmem [shape: bf16[36,16], index: 1, kind: input, shape index: {}]
  %s2 = inlined_call_operand.vmem [shape: f32[1,16], index: 2, kind: input, shape index: {}]
  %s3 = inlined_call_operand.vmem [shape: bf16[72,8], index: 3, kind: input, shape index: {}]
  %s4 = inlined_call_operand.vmem [shape: f32[1,8], index: 4, kind: input, shape index: {}]
  %s5 = inlined_call_operand.vmem [shape: f32[2,64,8], index: 5, kind: output, shape index: {}]
  %s6 = sld [smem:[#allocation0]]
  $region57: #{tpu_custom_call.1} parent=0
    _
  %s8 = ssub.s32 1, %s6
  %s9 = scalar_select 0, %s8, %s6
  loop: start=0, step=1, limit=4
  $region2: #{tpu_custom_call.1} parent=0 // loop_pre_header
    _
  $region3: #{tpu_custom_call.1} parent=0 // loop_header
    %s11 = sphi 0, %s15
    %p12 = scmp.ge.s32.totalorder %s11, 4
    %s21 = sphi 0, %s23
    %s24 = sphi 0, %s21
    %s25 = sphi 0, %s24
    %s41 = sphi 0, %s25
    %s45 = sphi 0, %s45
    %s47 = sphi 0, %s45
    %s48 = sphi 0, %s47
    %s62 = sphi 0, %s48
    %s66 = sphi 0, %s66
    %s68 = sphi 0, %s66
    %s69 = sphi 0, %s68
    %s83 = sphi 0, %s69
    %s87 = sphi 0, %s87
    %s89 = sphi 0, %s87
    %s90 = sphi 0, %s89
    %s104 = sphi 0, %s90
    %s108 = sphi 0, %s108
    %s110 = sphi 0, %s108
    %s111 = sphi 0, %s110
    %s125 = sphi 0, %s111
    %s131 = sphi 0, %s133
    %s134 = sphi 0, %s131
    %s135 = sphi 0, %s134
    %s151 = sphi 0, %s135
  $region4: #{tpu_custom_call.1} parent=0 // loop_header_branch
    %14 = sbr.rel (%p12) target = $region8
  $region5: #{tpu_custom_call.1} parent=0 // loop_body
    %s16 = ssub.s32 %s11, 1
    %s17 = ssub.s32 %s11, 2
    %s18 = sadd.s32 %s11, 1
    %s19 = ssub.s32 %s11, %s18
    %p20 = scmp.eq.s32.totalorder %s19, 0
    %s22 = sadd.s32 %s21, 1
    %s23 = scalar_select %p20, %s21, %s22
    %p26 = pneg %p20
    %p27 = scmp.eq.s32.totalorder %s11, 1
    %p28 = por %p26, %p27
    %p29 = scmp.ne.s32.totalorder %s21, %s24
    %p30 = scmp.eq.s32.totalorder %s11, 0
    %p31 = por %p29, %p30
    %p32 = scmp.ne.s32.totalorder %s21, %s24
    %p33 = scmp.eq.s32.totalorder %s16, 1
    %p34 = por %p32, %p33
    %p35 = scmp.ne.s32.totalorder %s24, %s25
    %p36 = scmp.eq.s32.totalorder %s16, 0
    %p37 = por %p35, %p36
    %p38 = scmp.ne.s32.totalorder %s24, %s25
    %p39 = scmp.eq.s32.totalorder %s17, 1
    %p40 = por %p38, %p39
    %p42 = scmp.ne.s32.totalorder %s25, %s41
    %p43 = scmp.eq.s32.totalorder %s17, 0
    %p44 = por %p42, %p43
    %s46 = sadd.s32 %s45, 1
    %p49 = scmp.eq.s32.totalorder %s11, 1
    %p50 = scmp.ne.s32.totalorder %s45, %s47
    %p51 = scmp.eq.s32.totalorder %s11, 0
    %p52 = por %p50, %p51
    %p53 = scmp.ne.s32.totalorder %s45, %s47
    %p54 = scmp.eq.s32.totalorder %s16, 1
    %p55 = por %p53, %p54
    %p56 = scmp.ne.s32.totalorder %s47, %s48
    %p57 = scmp.eq.s32.totalorder %s16, 0
    %p58 = por %p56, %p57
    %p59 = scmp.ne.s32.totalorder %s47, %s48
    %p60 = scmp.eq.s32.totalorder %s17, 1
    %p61 = por %p59, %p60
    %p63 = scmp.ne.s32.totalorder %s48, %s62
    %p64 = scmp.eq.s32.totalorder %s17, 0
    %p65 = por %p63, %p64
    %s67 = sadd.s32 %s66, 1
    %p70 = scmp.eq.s32.totalorder %s11, 1
    %p71 = scmp.ne.s32.totalorder %s66, %s68
    %p72 = scmp.eq.s32.totalorder %s11, 0
    %p73 = por %p71, %p72
    %p74 = scmp.ne.s32.totalorder %s66, %s68
    %p75 = scmp.eq.s32.totalorder %s16, 1
    %p76 = por %p74, %p75
    %p77 = scmp.ne.s32.totalorder %s68, %s69
    %p78 = scmp.eq.s32.totalorder %s16, 0
    %p79 = por %p77, %p78
    %p80 = scmp.ne.s32.totalorder %s68, %s69
    %p81 = scmp.eq.s32.totalorder %s17, 1
    %p82 = por %p80, %p81
    %p84 = scmp.ne.s32.totalorder %s69, %s83
    %p85 = scmp.eq.s32.totalorder %s17, 0
    %p86 = por %p84, %p85
    %s88 = sadd.s32 %s87, 1
    %p91 = scmp.eq.s32.totalorder %s11, 1
    %p92 = scmp.ne.s32.totalorder %s87, %s89
    %p93 = scmp.eq.s32.totalorder %s11, 0
    %p94 = por %p92, %p93
    %p95 = scmp.ne.s32.totalorder %s87, %s89
    %p96 = scmp.eq.s32.totalorder %s16, 1
    %p97 = por %p95, %p96
    %p98 = scmp.ne.s32.totalorder %s89, %s90
    %p99 = scmp.eq.s32.totalorder %s16, 0
    %p100 = por %p98, %p99
    %p101 = scmp.ne.s32.totalorder %s89, %s90
    %p102 = scmp.eq.s32.totalorder %s17, 1
    %p103 = por %p101, %p102
    %p105 = scmp.ne.s32.totalorder %s90, %s104
    %p106 = scmp.eq.s32.totalorder %s17, 0
    %p107 = por %p105, %p106
    %s109 = sadd.s32 %s108, 1
    %p112 = scmp.eq.s32.totalorder %s11, 1
    %p113 = scmp.ne.s32.totalorder %s108, %s110
    %p114 = scmp.eq.s32.totalorder %s11, 0
    %p115 = por %p113, %p114
    %p116 = scmp.ne.s32.totalorder %s108, %s110
    %p117 = scmp.eq.s32.totalorder %s16, 1
    %p118 = por %p116, %p117
    %p119 = scmp.ne.s32.totalorder %s110, %s111
    %p120 = scmp.eq.s32.totalorder %s16, 0
    %p121 = por %p119, %p120
    %p122 = scmp.ne.s32.totalorder %s110, %s111
    %p123 = scmp.eq.s32.totalorder %s17, 1
    %p124 = por %p122, %p123
    %p126 = scmp.ne.s32.totalorder %s111, %s125
    %p127 = scmp.eq.s32.totalorder %s17, 0
    %p128 = por %p126, %p127
    %s129 = ssub.s32 %s11, %s18
    %p130 = scmp.eq.s32.totalorder %s129, 0
    %s132 = sadd.s32 %s131, 1
    %s133 = scalar_select %p130, %s131, %s132
    %p136 = pneg %p130
    %p137 = scmp.eq.s32.totalorder %s11, 1
    %p138 = por %p136, %p137
    %p139 = scmp.ne.s32.totalorder %s131, %s134
    %p140 = scmp.eq.s32.totalorder %s11, 0
    %p141 = por %p139, %p140
    %p142 = scmp.ne.s32.totalorder %s131, %s134
    %p143 = scmp.eq.s32.totalorder %s16, 1
    %p144 = por %p142, %p143
    %p145 = scmp.ne.s32.totalorder %s134, %s135
    %p146 = scmp.eq.s32.totalorder %s16, 0
    %p147 = por %p145, %p146
    %p148 = scmp.ne.s32.totalorder %s134, %s135
    %p149 = scmp.eq.s32.totalorder %s17, 1
    %p150 = por %p148, %p149
    %p152 = scmp.ne.s32.totalorder %s135, %s151
    %p153 = scmp.eq.s32.totalorder %s17, 0
    %p154 = por %p152, %p153
    %p155 = scmp.le.s32.totalorder 1, %s11
    %p156 = scmp.lt.s32.totalorder %s11, 3
    %p157 = pnand %p155, %p156
    %p158 = pneg %p157
    // Predicated region
    $region9: #{tpu_custom_call.1} parent=5 // pred_check
      _
    $region10: #{tpu_custom_call.1} parent=5 // pred_check_branch
      %160 = sbr.rel (%p157) target = $region12
    $region11: #{tpu_custom_call.1} parent=5 // pred_region
      %s161 = ssub.s32 %s11, 1
      // Predicated region
      $region13: #{tpu_custom_call.1} parent=11 // pred_check
        %p162 = pneg %p58
      $region14: #{tpu_custom_call.1} parent=11 // pred_check_branch
        %164 = sbr.rel (%p162) target = $region16
      $region15: #{tpu_custom_call.1} parent=11 // pred_region
        _
      $region16: #{tpu_custom_call.1} parent=11 // pred_fallthru
        _
      // Predicated region
      $region17: #{tpu_custom_call.1} parent=11 // pred_check
        %p165 = pneg %p79
      $region18: #{tpu_custom_call.1} parent=11 // pred_check_branch
        %167 = sbr.rel (%p165) target = $region20
      $region19: #{tpu_custom_call.1} parent=11 // pred_region
        _
      $region20: #{tpu_custom_call.1} parent=11 // pred_fallthru
        _
      // Predicated region
      $region21: #{tpu_custom_call.1} parent=11 // pred_check
        %p168 = pneg %p100
      $region22: #{tpu_custom_call.1} parent=11 // pred_check_branch
        %170 = sbr.rel (%p168) target = $region24
      $region23: #{tpu_custom_call.1} parent=11 // pred_region
        _
      $region24: #{tpu_custom_call.1} parent=11 // pred_fallthru
        _
      // Predicated region
      $region25: #{tpu_custom_call.1} parent=11 // pred_check
        %p171 = pneg %p121
      $region26: #{tpu_custom_call.1} parent=11 // pred_check_branch
        %173 = sbr.rel (%p171) target = $region28
      $region27: #{tpu_custom_call.1} parent=11 // pred_region
        _
      $region28: #{tpu_custom_call.1} parent=11 // pred_fallthru
        _
    $region12: #{tpu_custom_call.1} parent=5 // pred_fallthru
      _
    %p174 = scmp.lt.s32.totalorder %s11, 2
    // Predicated region
    $region29: #{tpu_custom_call.1} parent=5 // pred_check
      %p175 = pneg %p174
    $region30: #{tpu_custom_call.1} parent=5 // pred_check_branch
      %177 = sbr.rel (%p175) target = $region32
    $region31: #{tpu_custom_call.1} parent=5 // pred_region
      // Predicated region
      $region33: #{tpu_custom_call.1} parent=31 // pred_check
        %p178 = pneg %p31
      $region34: #{tpu_custom_call.1} parent=31 // pred_check_branch
        %180 = sbr.rel (%p178) target = $region36
      $region35: #{tpu_custom_call.1} parent=31 // pred_region
        %p181 = scmp.lt.s32.totalorder %s11, 1
        %s182 = scalar_select %p181, %s11, 1
        %s183 = smul.addr %s182, 32
        %s184 = smul.addr %s183, 4
        %s185 = scalar_lea.vmem %s0, %s184
      $region36: #{tpu_custom_call.1} parent=31 // pred_fallthru
        _
    $region32: #{tpu_custom_call.1} parent=5 // pred_fallthru
      _
    %p186 = scmp.le.s32.totalorder 1, %s11
    %p187 = scmp.lt.s32.totalorder %s11, 3
    %p188 = pnand %p186, %p187
    %p189 = pneg %p188
    // Predicated region
    $region37: #{tpu_custom_call.1} parent=5 // pred_check
      _
    $region38: #{tpu_custom_call.1} parent=5 // pred_check_branch
      %191 = sbr.rel (%p188) target = $region40
    $region39: #{tpu_custom_call.1} parent=5 // pred_region
      %s192 = ssub.s32 %s11, 1
      %p193 = scmp.lt.s32.totalorder %s16, 1
      %s194 = scalar_select %p193, %s16, 1
      %s195 = smul.addr %s194, 32
      %s196 = smul.addr %s195, 4
      %s197 = scalar_lea.vmem %s0, %s196
      %p198 = pneg %p37
      %p199 = pneg %p34
      %p200 = pneg %p58
      %p201 = pneg %p55
      %p202 = pneg %p79
      %p203 = pneg %p76
      %p204 = pneg %p100
      %p205 = pneg %p97
      %p206 = pneg %p121
      %p207 = pneg %p118
      %p208 = pneg %p147
      %p209 = pneg %p144
      %p210 = scmp.lt.s32.totalorder %s16, 1
      %s211 = scalar_select %p210, %s16, 1
      %s212 = smul.addr %s211, 8
      %s213 = smul.addr %s212, 8
      %s214 = scalar_lea.vmem %s5, %s213
      %p215 = scmp.lt.s32.totalorder %s16, 1
      %s216 = scalar_select %p215, %s16, 1
      %s217 = smul.addr %s216, 32
      %s218 = smul.addr %s217, 4
      %s219 = scalar_lea.vmem %s0, %s218
      %p220 = scmp.lt.s32.totalorder %s16, 1
      %s221 = scalar_select %p220, %s16, 1
      %s222 = smul.addr %s221, 8
      %s223 = smul.addr %s222, 8
      %s224 = scalar_lea.vmem %s5, %s223
      %p227 = scmp.eq.s32.totalorder %s16, 0
      // Predicated region
      $region41: #{tpu_custom_call.1} parent=39 // pred_check
        %p228 = pneg %p227
      $region42: #{tpu_custom_call.1} parent=39 // pred_check_branch
        %230 = sbr.rel (%p228) target = $region44
      $region43: #{tpu_custom_call.1} parent=39 // pred_region
        %vm231 = vcmask 27648
        %232 = vst.msk [vmem:[#allocation2] sm:$0xf] %vm231, 0
        %vm233 = vcmask 24576
        %234 = vst.msk [vmem:[#allocation2 + $0x4] sm:$0x1] %vm233, 0
        %s235 = scalar_lea.vmem [#allocation2], 72
        %236 = vst.msk [vmem:[%s235] sm:$0xf] %vm231, 0
        %237 = vst.msk [vmem:[%s235 + $0x4] sm:$0x1] %vm233, 0
        %s238 = scalar_lea.vmem [#allocation2], 8
        %vm239 = vcmask 24576
        %vm240 = vsmask.f32 256
        %vm241 = vmand %vm239, %vm240
        %v242 = vld [vmem:[%s238] sm:$0x1]
        %v243 = vsel %vm241, 0, %v242
        %244 = vst [vmem:[%s238] sm:$0x1] %v243
        %v245 = vld [vmem:[%s238 + $0x8] sm:$0x1]
        %v246 = vsel %vm241, 0, %v245
        %247 = vst [vmem:[%s238 + $0x8] sm:$0x1] %v246
        %v248 = vld [vmem:[%s238 + $0x10] sm:$0x1]
        %v249 = vsel %vm241, 0, %v248
        %250 = vst [vmem:[%s238 + $0x10] sm:$0x1] %v249
        %v251 = vld [vmem:[%s238 + $0x18] sm:$0x1]
        %v252 = vsel %vm241, 0, %v251
        %253 = vst [vmem:[%s238 + $0x18] sm:$0x1] %v252
        %v254 = vld [vmem:[%s238 + $0x20] sm:$0x1]
        %v255 = vsel %vm241, 0, %v254
        %256 = vst [vmem:[%s238 + $0x20] sm:$0x1] %v255
        %v257 = vld [vmem:[%s238 + $0x28] sm:$0x1]
        %v258 = vsel %vm241, 0, %v257
        %259 = vst [vmem:[%s238 + $0x28] sm:$0x1] %v258
        %v260 = vld [vmem:[%s238 + $0x30] sm:$0x1]
        %v261 = vsel %vm241, 0, %v260
        %262 = vst [vmem:[%s238 + $0x30] sm:$0x1] %v261
        %v263 = vld [vmem:[%s238 + $0x38] sm:$0x1]
        %v264 = vsel %vm241, 0, %v263
        %265 = vst [vmem:[%s238 + $0x38] sm:$0x1] %v264
        %vm266 = vsmask.f32 7938
        %vm267 = vmand %vm239, %vm266
        %v268 = vld [vmem:[%s238 + $0x4] sm:$0x1]
        %v269 = vsel %vm267, 0, %v268
        %270 = vst [vmem:[%s238 + $0x4] sm:$0x1] %v269
        %v271 = vld [vmem:[%s238 + $0xc] sm:$0x1]
        %v272 = vsel %vm267, 0, %v271
        %273 = vst [vmem:[%s238 + $0xc] sm:$0x1] %v272
        %v274 = vld [vmem:[%s238 + $0x14] sm:$0x1]
        %v275 = vsel %vm267, 0, %v274
        %276 = vst [vmem:[%s238 + $0x14] sm:$0x1] %v275
        %v277 = vld [vmem:[%s238 + $0x1c] sm:$0x1]
        %v278 = vsel %vm267, 0, %v277
        %279 = vst [vmem:[%s238 + $0x1c] sm:$0x1] %v278
        %v280 = vld [vmem:[%s238 + $0x24] sm:$0x1]
        %v281 = vsel %vm267, 0, %v280
        %282 = vst [vmem:[%s238 + $0x24] sm:$0x1] %v281
        %v283 = vld [vmem:[%s238 + $0x2c] sm:$0x1]
        %v284 = vsel %vm267, 0, %v283
        %285 = vst [vmem:[%s238 + $0x2c] sm:$0x1] %v284
        %v286 = vld [vmem:[%s238 + $0x34] sm:$0x1]
        %v287 = vsel %vm267, 0, %v286
        %288 = vst [vmem:[%s238 + $0x34] sm:$0x1] %v287
        %v289 = vld [vmem:[%s238 + $0x3c] sm:$0x1]
        %v290 = vsel %vm267, 0, %v289
        %291 = vst [vmem:[%s238 + $0x3c] sm:$0x1] %v290
        %vm292 = vcmask 60416
        %293 = vst.msk [vmem:[#allocation3] sm:$0xf] %vm292, 0
        %vm294 = vcmask 57344
        %295 = vst.msk [vmem:[#allocation3 + $0x4] sm:$0x1] %vm294, 0
        %s296 = scalar_lea.vmem [#allocation3], 72
        %297 = vst.msk [vmem:[%s296] sm:$0xf] %vm292, 0
        %298 = vst.msk [vmem:[%s296 + $0x4] sm:$0x1] %vm294, 0
        %s299 = scalar_lea.vmem [#allocation3], 8
        %vm300 = vcmask 57344
        %vm301 = vmand %vm300, %vm240
        %v302 = vld [vmem:[%s299] sm:$0x1]
        %v303 = vsel %vm301, 0, %v302
        %304 = vst [vmem:[%s299] sm:$0x1] %v303
        %v305 = vld [vmem:[%s299 + $0x8] sm:$0x1]
        %v306 = vsel %vm301, 0, %v305
        %307 = vst [vmem:[%s299 + $0x8] sm:$0x1] %v306
        %v308 = vld [vmem:[%s299 + $0x10] sm:$0x1]
        %v309 = vsel %vm301, 0, %v308
        %310 = vst [vmem:[%s299 + $0x10] sm:$0x1] %v309
        %v311 = vld [vmem:[%s299 + $0x18] sm:$0x1]
        %v312 = vsel %vm301, 0, %v311
        %313 = vst [vmem:[%s299 + $0x18] sm:$0x1] %v312
        %v314 = vld [vmem:[%s299 + $0x20] sm:$0x1]
        %v315 = vsel %vm301, 0, %v314
        %316 = vst [vmem:[%s299 + $0x20] sm:$0x1] %v315
        %v317 = vld [vmem:[%s299 + $0x28] sm:$0x1]
        %v318 = vsel %vm301, 0, %v317
        %319 = vst [vmem:[%s299 + $0x28] sm:$0x1] %v318
        %v320 = vld [vmem:[%s299 + $0x30] sm:$0x1]
        %v321 = vsel %vm301, 0, %v320
        %322 = vst [vmem:[%s299 + $0x30] sm:$0x1] %v321
        %v323 = vld [vmem:[%s299 + $0x38] sm:$0x1]
        %v324 = vsel %vm301, 0, %v323
        %325 = vst [vmem:[%s299 + $0x38] sm:$0x1] %v324
        %vm326 = vmand %vm300, %vm266
        %v327 = vld [vmem:[%s299 + $0x4] sm:$0x1]
        %v328 = vsel %vm326, 0, %v327
        %329 = vst [vmem:[%s299 + $0x4] sm:$0x1] %v328
        %v330 = vld [vmem:[%s299 + $0xc] sm:$0x1]
        %v331 = vsel %vm326, 0, %v330
        %332 = vst [vmem:[%s299 + $0xc] sm:$0x1] %v331
        %v333 = vld [vmem:[%s299 + $0x14] sm:$0x1]
        %v334 = vsel %vm326, 0, %v333
        %335 = vst [vmem:[%s299 + $0x14] sm:$0x1] %v334
        %v336 = vld [vmem:[%s299 + $0x1c] sm:$0x1]
        %v337 = vsel %vm326, 0, %v336
        %338 = vst [vmem:[%s299 + $0x1c] sm:$0x1] %v337
        %v339 = vld [vmem:[%s299 + $0x24] sm:$0x1]
        %v340 = vsel %vm326, 0, %v339
        %341 = vst [vmem:[%s299 + $0x24] sm:$0x1] %v340
        %v342 = vld [vmem:[%s299 + $0x2c] sm:$0x1]
        %v343 = vsel %vm326, 0, %v342
        %344 = vst [vmem:[%s299 + $0x2c] sm:$0x1] %v343
        %v345 = vld [vmem:[%s299 + $0x34] sm:$0x1]
        %v346 = vsel %vm326, 0, %v345
        %347 = vst [vmem:[%s299 + $0x34] sm:$0x1] %v346
        %v348 = vld [vmem:[%s299 + $0x3c] sm:$0x1]
        %v349 = vsel %vm326, 0, %v348
        %350 = vst [vmem:[%s299 + $0x3c] sm:$0x1] %v349
      $region44: #{tpu_custom_call.1} parent=39 // pred_fallthru
        _
      %v351 = vld [vmem:[%s219] sm:$0xf]
      %v352 = vld [vmem:[%s219 + $0x4] sm:$0xf]
      %v353 = vld [vmem:[%s219 + $0x8] sm:$0xf]
      %v354 = vld [vmem:[%s219 + $0xc] sm:$0xf]
      %v355 = vld [vmem:[%s219 + $0x10] sm:$0xf]
      %v356 = vld [vmem:[%s219 + $0x14] sm:$0xf]
      %v357 = vld [vmem:[%s219 + $0x18] sm:$0xf]
      %v358 = vld [vmem:[%s219 + $0x1c] sm:$0xf]
      %v359 = vld [vmem:[%s219 + $0x20] sm:$0xf]
      %v360 = vld [vmem:[%s219 + $0x24] sm:$0xf]
      %v361 = vld [vmem:[%s219 + $0x28] sm:$0xf]
      %v362 = vld [vmem:[%s219 + $0x2c] sm:$0xf]
      %v363 = vld [vmem:[%s219 + $0x30] sm:$0xf]
      %v364 = vld [vmem:[%s219 + $0x34] sm:$0xf]
      %v365 = vld [vmem:[%s219 + $0x38] sm:$0xf]
      %v366 = vld [vmem:[%s219 + $0x3c] sm:$0xf]
      %v367 = vld [vmem:[%s219 + $0x40] sm:$0xf]
      %v368 = vld [vmem:[%s219 + $0x44] sm:$0xf]
      %v369 = vld [vmem:[%s219 + $0x48] sm:$0xf]
      %v370 = vld [vmem:[%s219 + $0x4c] sm:$0xf]
      %v371 = vld [vmem:[%s219 + $0x50] sm:$0xf]
      %v372 = vld [vmem:[%s219 + $0x54] sm:$0xf]
      %v373 = vld [vmem:[%s219 + $0x58] sm:$0xf]
      %v374 = vld [vmem:[%s219 + $0x5c] sm:$0xf]
      %v375 = vld [vmem:[%s219 + $0x60] sm:$0xf]
      %v376 = vld [vmem:[%s219 + $0x64] sm:$0xf]
      %v377 = vld [vmem:[%s219 + $0x68] sm:$0xf]
      %v378 = vld [vmem:[%s219 + $0x6c] sm:$0xf]
      %v379 = vld [vmem:[%s219 + $0x70] sm:$0xf]
      %v380 = vld [vmem:[%s219 + $0x74] sm:$0xf]
      %v381 = vld [vmem:[%s219 + $0x78] sm:$0xf]
      %v382 = vld [vmem:[%s219 + $0x7c] sm:$0xf]
      %vm383 = vcmask 27648
      %v386 = vsel %vm383, %v351, 4286644096
      %v389 = vsel %vm383, %v359, 4286644096
      %v391 = vmax.bf16 %v386, %v389
      %v393 = vsel %vm383, %v367, 4286644096
      %v395 = vmax.bf16 %v391, %v393
      %v397 = vsel %vm383, %v375, 4286644096
      %v399 = vmax.bf16 %v395, %v397
      %v401 = vsel %vm383, %v352, 4286644096
      %v404 = vsel %vm383, %v360, 4286644096
      %v406 = vmax.bf16 %v401, %v404
      %v408 = vsel %vm383, %v368, 4286644096
      %v410 = vmax.bf16 %v406, %v408
      %v412 = vsel %vm383, %v376, 4286644096
      %v414 = vmax.bf16 %v410, %v412
      %v416 = vsel %vm383, %v353, 4286644096
      %v419 = vsel %vm383, %v361, 4286644096
      %v421 = vmax.bf16 %v416, %v419
      %v423 = vsel %vm383, %v369, 4286644096
      %v425 = vmax.bf16 %v421, %v423
      %v427 = vsel %vm383, %v377, 4286644096
      %v429 = vmax.bf16 %v425, %v427
      %v431 = vsel %vm383, %v354, 4286644096
      %v434 = vsel %vm383, %v362, 4286644096
      %v436 = vmax.bf16 %v431, %v434
      %v438 = vsel %vm383, %v370, 4286644096
      %v440 = vmax.bf16 %v436, %v438
      %v442 = vsel %vm383, %v378, 4286644096
      %v444 = vmax.bf16 %v440, %v442
      %v446 = vsel %vm383, %v355, 4286644096
      %v449 = vsel %vm383, %v363, 4286644096
      %v451 = vmax.bf16 %v446, %v449
      %v453 = vsel %vm383, %v371, 4286644096
      %v455 = vmax.bf16 %v451, %v453
      %v457 = vsel %vm383, %v379, 4286644096
      %v459 = vmax.bf16 %v455, %v457
      %v461 = vsel %vm383, %v356, 4286644096
      %v464 = vsel %vm383, %v364, 4286644096
      %v466 = vmax.bf16 %v461, %v464
      %v468 = vsel %vm383, %v372, 4286644096
      %v470 = vmax.bf16 %v466, %v468
      %v472 = vsel %vm383, %v380, 4286644096
      %v474 = vmax.bf16 %v470, %v472
      %v476 = vsel %vm383, %v357, 4286644096
      %v479 = vsel %vm383, %v365, 4286644096
      %v481 = vmax.bf16 %v476, %v479
      %v483 = vsel %vm383, %v373, 4286644096
      %v485 = vmax.bf16 %v481, %v483
      %v487 = vsel %vm383, %v381, 4286644096
      %v489 = vmax.bf16 %v485, %v487
      %v491 = vsel %vm383, %v358, 4286644096
      %v494 = vsel %vm383, %v366, 4286644096
      %v496 = vmax.bf16 %v491, %v494
      %v498 = vsel %vm383, %v374, 4286644096
      %v500 = vmax.bf16 %v496, %v498
      %v502 = vsel %vm383, %v382, 4286644096
      %v504 = vmax.bf16 %v500, %v502
      %v506 = vshrl.u32 %v399, 16
      %v508 = vrot.slane %v506, 7
      %v509 = vshll.u32 %v399, 16
      %v511 = vor.u32 %v508, %v509
      %v512 = vrot.slane %v508, 4
      %v514 = vshrl.u32 %v414, 16
      %v516 = vrot.slane %v514, 7
      %v517 = vshll.u32 %v414, 16
      %v519 = vor.u32 %v516, %v517
      %v520 = vrot.slane %v516, 4
      %v522 = vshrl.u32 %v429, 16
      %v524 = vrot.slane %v522, 7
      %v525 = vshll.u32 %v429, 16
      %v527 = vor.u32 %v524, %v525
      %v528 = vrot.slane %v524, 4
      %v530 = vshrl.u32 %v444, 16
      %v532 = vrot.slane %v530, 7
      %v533 = vshll.u32 %v444, 16
      %v535 = vor.u32 %v532, %v533
      %v536 = vrot.slane %v532, 4
      %v538 = vshrl.u32 %v459, 16
      %v540 = vrot.slane %v538, 7
      %v541 = vshll.u32 %v459, 16
      %v543 = vor.u32 %v540, %v541
      %v544 = vrot.slane %v540, 4
      %v546 = vshrl.u32 %v474, 16
      %v548 = vrot.slane %v546, 7
      %v549 = vshll.u32 %v474, 16
      %v551 = vor.u32 %v548, %v549
      %v552 = vrot.slane %v548, 4
      %v554 = vshrl.u32 %v489, 16
      %v556 = vrot.slane %v554, 7
      %v557 = vshll.u32 %v489, 16
      %v559 = vor.u32 %v556, %v557
      %v560 = vrot.slane %v556, 4
      %v562 = vshrl.u32 %v504, 16
      %v564 = vrot.slane %v562, 7
      %v565 = vshll.u32 %v504, 16
      %v567 = vor.u32 %v564, %v565
      %v568 = vrot.slane %v564, 4
      %s585 = scalar_lea.vmem [#allocation2], 8
      %vm586 = vcmask 27648
      %vm587 = vsmask.f32 7938
      %vm588 = vmand %vm586, %vm587
      %v589 = vld [vmem:[%s585] sm:$0xf]
      %v590 = vsel %vm588, %v511, %v589
      %591 = vst [vmem:[%s585] sm:$0xf] %v590
      %vm592 = vcmask 24576
      %vm593 = vsmask.f32 256
      %vm594 = vmand %vm592, %vm593
      %v595 = vld [vmem:[%s585 + $0x4] sm:$0x1]
      %v596 = vsel %vm594, %v512, %v595
      %597 = vst [vmem:[%s585 + $0x4] sm:$0x1] %v596
      %v598 = vld [vmem:[%s585 + $0x8] sm:$0xf]
      %v599 = vsel %vm588, %v519, %v598
      %600 = vst [vmem:[%s585 + $0x8] sm:$0xf] %v599
      %v601 = vld [vmem:[%s585 + $0xc] sm:$0x1]
      %v602 = vsel %vm594, %v520, %v601
      %603 = vst [vmem:[%s585 + $0xc] sm:$0x1] %v602
      %v604 = vld [vmem:[%s585 + $0x10] sm:$0xf]
      %v605 = vsel %vm588, %v527, %v604
      %606 = vst [vmem:[%s585 + $0x10] sm:$0xf] %v605
      %v607 = vld [vmem:[%s585 + $0x14] sm:$0x1]
      %v608 = vsel %vm594, %v528, %v607
      %609 = vst [vmem:[%s585 + $0x14] sm:$0x1] %v608
      %v610 = vld [vmem:[%s585 + $0x18] sm:$0xf]
      %v611 = vsel %vm588, %v535, %v610
      %612 = vst [vmem:[%s585 + $0x18] sm:$0xf] %v611
      %v613 = vld [vmem:[%s585 + $0x1c] sm:$0x1]
      %v614 = vsel %vm594, %v536, %v613
      %615 = vst [vmem:[%s585 + $0x1c] sm:$0x1] %v614
      %v616 = vld [vmem:[%s585 + $0x20] sm:$0xf]
      %v617 = vsel %vm588, %v543, %v616
      %618 = vst [vmem:[%s585 + $0x20] sm:$0xf] %v617
      %v619 = vld [vmem:[%s585 + $0x24] sm:$0x1]
      %v620 = vsel %vm594, %v544, %v619
      %621 = vst [vmem:[%s585 + $0x24] sm:$0x1] %v620
      %v622 = vld [vmem:[%s585 + $0x28] sm:$0xf]
      %v623 = vsel %vm588, %v551, %v622
      %624 = vst [vmem:[%s585 + $0x28] sm:$0xf] %v623
      %v625 = vld [vmem:[%s585 + $0x2c] sm:$0x1]
      %v626 = vsel %vm594, %v552, %v625
      %627 = vst [vmem:[%s585 + $0x2c] sm:$0x1] %v626
      %v628 = vld [vmem:[%s585 + $0x30] sm:$0xf]
      %v629 = vsel %vm588, %v559, %v628
      %630 = vst [vmem:[%s585 + $0x30] sm:$0xf] %v629
      %v631 = vld [vmem:[%s585 + $0x34] sm:$0x1]
      %v632 = vsel %vm594, %v560, %v631
      %633 = vst [vmem:[%s585 + $0x34] sm:$0x1] %v632
      %v634 = vld [vmem:[%s585 + $0x38] sm:$0xf]
      %v635 = vsel %vm588, %v567, %v634
      %636 = vst [vmem:[%s585 + $0x38] sm:$0xf] %v635
      %v637 = vld [vmem:[%s585 + $0x3c] sm:$0x1]
      %v638 = vsel %vm594, %v568, %v637
      %639 = vst [vmem:[%s585 + $0x3c] sm:$0x1] %v638
      %v640 = vld [vmem:[#allocation2] sm:$0xf]
      %v641 = vld [vmem:[#allocation2 + $0x8] sm:$0xf]
      %v642 = vld [vmem:[#allocation2 + $0x10] sm:$0xf]
      %v643 = vld [vmem:[#allocation2 + $0x18] sm:$0xf]
      %v644 = vld [vmem:[#allocation2 + $0x20] sm:$0xf]
      %v645 = vld [vmem:[#allocation2 + $0x28] sm:$0xf]
      %v646 = vld [vmem:[#allocation2 + $0x30] sm:$0xf]
      %v647 = vld [vmem:[#allocation2 + $0x38] sm:$0xf]
      %v648 = vld [vmem:[#allocation2 + $0x4] sm:$0x1]
      %v649 = vld [vmem:[#allocation2 + $0xc] sm:$0x1]
      %v650 = vld [vmem:[#allocation2 + $0x14] sm:$0x1]
      %v651 = vld [vmem:[#allocation2 + $0x1c] sm:$0x1]
      %v652 = vld [vmem:[#allocation2 + $0x24] sm:$0x1]
      %v653 = vld [vmem:[#allocation2 + $0x2c] sm:$0x1]
      %v654 = vld [vmem:[#allocation2 + $0x34] sm:$0x1]
      %v655 = vld [vmem:[#allocation2 + $0x3c] sm:$0x1]
      %vm656 = vsmask.f32 3328
      %vm657 = vsmask.f32 7440
      %vm658 = vmor %vm656, %vm657
      %v660 = vshrl.u32 %v640, 16
      %v662 = vrot.slane %v660, 4
      %v663 = vshll.u32 %v640, 16
      %v665 = vrot.slane %v663, 5
      %v666 = vor.u32 %v662, %v665
      %v667 = vrot.slane %v666, 4
      %v669 = vshll.u32 %v648, 16
      %v671 = vrot.slane %v669, 5
      %v672 = vsel %vm658, %v667, %v671
      %v674 = vshrl.u32 %v641, 16
      %v676 = vrot.slane %v674, 4
      %v677 = vshll.u32 %v641, 16
      %v679 = vrot.slane %v677, 5
      %v680 = vor.u32 %v676, %v679
      %v681 = vrot.slane %v680, 4
      %v683 = vshll.u32 %v649, 16
      %v685 = vrot.slane %v683, 5
      %v686 = vsel %vm658, %v681, %v685
      %v688 = vshrl.u32 %v642, 16
      %v690 = vrot.slane %v688, 4
      %v691 = vshll.u32 %v642, 16
      %v693 = vrot.slane %v691, 5
      %v694 = vor.u32 %v690, %v693
      %v695 = vrot.slane %v694, 4
      %v697 = vshll.u32 %v650, 16
      %v699 = vrot.slane %v697, 5
      %v700 = vsel %vm658, %v695, %v699
      %v702 = vshrl.u32 %v643, 16
      %v704 = vrot.slane %v702, 4
      %v705 = vshll.u32 %v643, 16
      %v707 = vrot.slane %v705, 5
      %v708 = vor.u32 %v704, %v707
      %v709 = vrot.slane %v708, 4
      %v711 = vshll.u32 %v651, 16
      %v713 = vrot.slane %v711, 5
      %v714 = vsel %vm658, %v709, %v713
      %v716 = vshrl.u32 %v644, 16
      %v718 = vrot.slane %v716, 4
      %v719 = vshll.u32 %v644, 16
      %v721 = vrot.slane %v719, 5
      %v722 = vor.u32 %v718, %v721
      %v723 = vrot.slane %v722, 4
      %v725 = vshll.u32 %v652, 16
      %v727 = vrot.slane %v725, 5
      %v728 = vsel %vm658, %v723, %v727
      %v730 = vshrl.u32 %v645, 16
      %v732 = vrot.slane %v730, 4
      %v733 = vshll.u32 %v645, 16
      %v735 = vrot.slane %v733, 5
      %v736 = vor.u32 %v732, %v735
      %v737 = vrot.slane %v736, 4
      %v739 = vshll.u32 %v653, 16
      %v741 = vrot.slane %v739, 5
      %v742 = vsel %vm658, %v737, %v741
      %v744 = vshrl.u32 %v646, 16
      %v746 = vrot.slane %v744, 4
      %v747 = vshll.u32 %v646, 16
      %v749 = vrot.slane %v747, 5
      %v750 = vor.u32 %v746, %v749
      %v751 = vrot.slane %v750, 4
      %v753 = vshll.u32 %v654, 16
      %v755 = vrot.slane %v753, 5
      %v756 = vsel %vm658, %v751, %v755
      %v758 = vshrl.u32 %v647, 16
      %v760 = vrot.slane %v758, 4
      %v761 = vshll.u32 %v647, 16
      %v763 = vrot.slane %v761, 5
      %v764 = vor.u32 %v760, %v763
      %v765 = vrot.slane %v764, 4
      %v767 = vshll.u32 %v655, 16
      %v769 = vrot.slane %v767, 5
      %v770 = vsel %vm658, %v765, %v769
      %v771 = vld [vmem:[#allocation2] sm:$0xe]
      %v772 = vld [vmem:[#allocation2 + $0x8] sm:$0xe]
      %v773 = vld [vmem:[#allocation2 + $0x10] sm:$0xe]
      %v774 = vld [vmem:[#allocation2 + $0x18] sm:$0xe]
      %v775 = vld [vmem:[#allocation2 + $0x20] sm:$0xe]
      %v776 = vld [vmem:[#allocation2 + $0x28] sm:$0xe]
      %v777 = vld [vmem:[#allocation2 + $0x30] sm:$0xe]
      %v778 = vld [vmem:[#allocation2 + $0x38] sm:$0xe]
      %vm795 = vcmask 1042432
      %vm796 = vcmask 1046532
      %vm797 = vmor %vm795, %vm796
      %v798 = vrot.slane %v771, 5
      %v799 = vrot.slane %v798, 4
      %v800 = vrot.slane %v648, 5
      %v801 = vsel %vm797, %v799, %v800
      %v802 = vrot.slane %v772, 5
      %v803 = vrot.slane %v802, 4
      %v804 = vrot.slane %v649, 5
      %v805 = vsel %vm797, %v803, %v804
      %v806 = vrot.slane %v773, 5
      %v807 = vrot.slane %v806, 4
      %v808 = vrot.slane %v650, 5
      %v809 = vsel %vm797, %v807, %v808
      %v810 = vrot.slane %v774, 5
      %v811 = vrot.slane %v810, 4
      %v812 = vrot.slane %v651, 5
      %v813 = vsel %vm797, %v811, %v812
      %v814 = vrot.slane %v775, 5
      %v815 = vrot.slane %v814, 4
      %v816 = vrot.slane %v652, 5
      %v817 = vsel %vm797, %v815, %v816
      %v818 = vrot.slane %v776, 5
      %v819 = vrot.slane %v818, 4
      %v820 = vrot.slane %v653, 5
      %v821 = vsel %vm797, %v819, %v820
      %v822 = vrot.slane %v777, 5
      %v823 = vrot.slane %v822, 4
      %v824 = vrot.slane %v654, 5
      %v825 = vsel %vm797, %v823, %v824
      %v826 = vrot.slane %v778, 5
      %v827 = vrot.slane %v826, 4
      %v828 = vrot.slane %v655, 5
      %v829 = vsel %vm797, %v827, %v828
      %v830 = vld [vmem:[%s585] sm:$0xf]
      %v831 = vld [vmem:[%s585 + $0x8] sm:$0xf]
      %v832 = vld [vmem:[%s585 + $0x10] sm:$0xf]
      %v833 = vld [vmem:[%s585 + $0x18] sm:$0xf]
      %v834 = vld [vmem:[%s585 + $0x20] sm:$0xf]
      %v835 = vld [vmem:[%s585 + $0x28] sm:$0xf]
      %v836 = vld [vmem:[%s585 + $0x30] sm:$0xf]
      %v837 = vld [vmem:[%s585 + $0x38] sm:$0xf]
      %v838 = vld [vmem:[%s585 + $0x4] sm:$0x1]
      %v839 = vld [vmem:[%s585 + $0xc] sm:$0x1]
      %v840 = vld [vmem:[%s585 + $0x14] sm:$0x1]
      %v841 = vld [vmem:[%s585 + $0x1c] sm:$0x1]
      %v842 = vld [vmem:[%s585 + $0x24] sm:$0x1]
      %v843 = vld [vmem:[%s585 + $0x2c] sm:$0x1]
      %v844 = vld [vmem:[%s585 + $0x34] sm:$0x1]
      %v845 = vld [vmem:[%s585 + $0x3c] sm:$0x1]
      %v847 = vshrl.u32 %v830, 16
      %v849 = vrot.slane %v847, 4
      %v850 = vshll.u32 %v830, 16
      %v852 = vrot.slane %v850, 5
      %v853 = vor.u32 %v849, %v852
      %v854 = vrot.slane %v853, 4
      %v856 = vshll.u32 %v838, 16
      %v858 = vrot.slane %v856, 5
      %v859 = vsel %vm658, %v854, %v858
      %v861 = vshrl.u32 %v831, 16
      %v863 = vrot.slane %v861, 4
      %v864 = vshll.u32 %v831, 16
      %v866 = vrot.slane %v864, 5
      %v867 = vor.u32 %v863, %v866
      %v868 = vrot.slane %v867, 4
      %v870 = vshll.u32 %v839, 16
      %v872 = vrot.slane %v870, 5
      %v873 = vsel %vm658, %v868, %v872
      %v875 = vshrl.u32 %v832, 16
      %v877 = vrot.slane %v875, 4
      %v878 = vshll.u32 %v832, 16
      %v880 = vrot.slane %v878, 5
      %v881 = vor.u32 %v877, %v880
      %v882 = vrot.slane %v881, 4
      %v884 = vshll.u32 %v840, 16
      %v886 = vrot.slane %v884, 5
      %v887 = vsel %vm658, %v882, %v886
      %v889 = vshrl.u32 %v833, 16
      %v891 = vrot.slane %v889, 4
      %v892 = vshll.u32 %v833, 16
      %v894 = vrot.slane %v892, 5
      %v895 = vor.u32 %v891, %v894
      %v896 = vrot.slane %v895, 4
      %v898 = vshll.u32 %v841, 16
      %v900 = vrot.slane %v898, 5
      %v901 = vsel %vm658, %v896, %v900
      %v903 = vshrl.u32 %v834, 16
      %v905 = vrot.slane %v903, 4
      %v906 = vshll.u32 %v834, 16
      %v908 = vrot.slane %v906, 5
      %v909 = vor.u32 %v905, %v908
      %v910 = vrot.slane %v909, 4
      %v912 = vshll.u32 %v842, 16
      %v914 = vrot.slane %v912, 5
      %v915 = vsel %vm658, %v910, %v914
      %v917 = vshrl.u32 %v835, 16
      %v919 = vrot.slane %v917, 4
      %v920 = vshll.u32 %v835, 16
      %v922 = vrot.slane %v920, 5
      %v923 = vor.u32 %v919, %v922
      %v924 = vrot.slane %v923, 4
      %v926 = vshll.u32 %v843, 16
      %v928 = vrot.slane %v926, 5
      %v929 = vsel %vm658, %v924, %v928
      %v931 = vshrl.u32 %v836, 16
      %v933 = vrot.slane %v931, 4
      %v934 = vshll.u32 %v836, 16
      %v936 = vrot.slane %v934, 5
      %v937 = vor.u32 %v933, %v936
      %v938 = vrot.slane %v937, 4
      %v940 = vshll.u32 %v844, 16
      %v942 = vrot.slane %v940, 5
      %v943 = vsel %vm658, %v938, %v942
      %v945 = vshrl.u32 %v837, 16
      %v947 = vrot.slane %v945, 4
      %v948 = vshll.u32 %v837, 16
      %v950 = vrot.slane %v948, 5
      %v951 = vor.u32 %v947, %v950
      %v952 = vrot.slane %v951, 4
      %v954 = vshll.u32 %v845, 16
      %v956 = vrot.slane %v954, 5
      %v957 = vsel %vm658, %v952, %v956
      %v958 = vld [vmem:[%s585] sm:$0xe]
      %v959 = vld [vmem:[%s585 + $0x8] sm:$0xe]
      %v960 = vld [vmem:[%s585 + $0x10] sm:$0xe]
      %v961 = vld [vmem:[%s585 + $0x18] sm:$0xe]
      %v962 = vld [vmem:[%s585 + $0x20] sm:$0xe]
      %v963 = vld [vmem:[%s585 + $0x28] sm:$0xe]
      %v964 = vld [vmem:[%s585 + $0x30] sm:$0xe]
      %v965 = vld [vmem:[%s585 + $0x38] sm:$0xe]
      %v982 = vrot.slane %v958, 5
      %v983 = vrot.slane %v982, 4
      %v984 = vrot.slane %v838, 5
      %v985 = vsel %vm797, %v983, %v984
      %v986 = vrot.slane %v959, 5
      %v987 = vrot.slane %v986, 4
      %v988 = vrot.slane %v839, 5
      %v989 = vsel %vm797, %v987, %v988
      %v990 = vrot.slane %v960, 5
      %v991 = vrot.slane %v990, 4
      %v992 = vrot.slane %v840, 5
      %v993 = vsel %vm797, %v991, %v992
      %v994 = vrot.slane %v961, 5
      %v995 = vrot.slane %v994, 4
      %v996 = vrot.slane %v841, 5
      %v997 = vsel %vm797, %v995, %v996
      %v998 = vrot.slane %v962, 5
      %v999 = vrot.slane %v998, 4
      %v1000 = vrot.slane %v842, 5
      %v1001 = vsel %vm797, %v999, %v1000
      %v1002 = vrot.slane %v963, 5
      %v1003 = vrot.slane %v1002, 4
      %v1004 = vrot.slane %v843, 5
      %v1005 = vsel %vm797, %v1003, %v1004
      %v1006 = vrot.slane %v964, 5
      %v1007 = vrot.slane %v1006, 4
      %v1008 = vrot.slane %v844, 5
      %v1009 = vsel %vm797, %v1007, %v1008
      %v1010 = vrot.slane %v965, 5
      %v1011 = vrot.slane %v1010, 4
      %v1012 = vrot.slane %v845, 5
      %v1013 = vsel %vm797, %v1011, %v1012
      %s1014 = scalar_lea.vmem [#allocation2], 16
      %v1015 = vld [vmem:[%s1014] sm:$0xf]
      %v1016 = vld [vmem:[%s1014 + $0x8] sm:$0xf]
      %v1017 = vld [vmem:[%s1014 + $0x10] sm:$0xf]
      %v1018 = vld [vmem:[%s1014 + $0x18] sm:$0xf]
      %v1019 = vld [vmem:[%s1014 + $0x20] sm:$0xf]
      %v1020 = vld [vmem:[%s1014 + $0x28] sm:$0xf]
      %v1021 = vld [vmem:[%s1014 + $0x30] sm:$0xf]
      %v1022 = vld [vmem:[%s1014 + $0x38] sm:$0xf]
      %v1023 = vld [vmem:[%s1014 + $0x4] sm:$0x1]
      %v1024 = vld [vmem:[%s1014 + $0xc] sm:$0x1]
      %v1025 = vld [vmem:[%s1014 + $0x14] sm:$0x1]
      %v1026 = vld [vmem:[%s1014 + $0x1c] sm:$0x1]
      %v1027 = vld [vmem:[%s1014 + $0x24] sm:$0x1]
      %v1028 = vld [vmem:[%s1014 + $0x2c] sm:$0x1]
      %v1029 = vld [vmem:[%s1014 + $0x34] sm:$0x1]
      %v1030 = vld [vmem:[%s1014 + $0x3c] sm:$0x1]
      %v1032 = vshrl.u32 %v1015, 16
      %v1034 = vrot.slane %v1032, 4
      %v1035 = vshll.u32 %v1015, 16
      %v1037 = vrot.slane %v1035, 5
      %v1038 = vor.u32 %v1034, %v1037
      %v1039 = vrot.slane %v1038, 4
      %v1041 = vshll.u32 %v1023, 16
      %v1043 = vrot.slane %v1041, 5
      %v1044 = vsel %vm658, %v1039, %v1043
      %v1046 = vshrl.u32 %v1016, 16
      %v1048 = vrot.slane %v1046, 4
      %v1049 = vshll.u32 %v1016, 16
      %v1051 = vrot.slane %v1049, 5
      %v1052 = vor.u32 %v1048, %v1051
      %v1053 = vrot.slane %v1052, 4
      %v1055 = vshll.u32 %v1024, 16
      %v1057 = vrot.slane %v1055, 5
      %v1058 = vsel %vm658, %v1053, %v1057
      %v1060 = vshrl.u32 %v1017, 16
      %v1062 = vrot.slane %v1060, 4
      %v1063 = vshll.u32 %v1017, 16
      %v1065 = vrot.slane %v1063, 5
      %v1066 = vor.u32 %v1062, %v1065
      %v1067 = vrot.slane %v1066, 4
      %v1069 = vshll.u32 %v1025, 16
      %v1071 = vrot.slane %v1069, 5
      %v1072 = vsel %vm658, %v1067, %v1071
      %v1074 = vshrl.u32 %v1018, 16
      %v1076 = vrot.slane %v1074, 4
      %v1077 = vshll.u32 %v1018, 16
      %v1079 = vrot.slane %v1077, 5
      %v1080 = vor.u32 %v1076, %v1079
      %v1081 = vrot.slane %v1080, 4
      %v1083 = vshll.u32 %v1026, 16
      %v1085 = vrot.slane %v1083, 5
      %v1086 = vsel %vm658, %v1081, %v1085
      %v1088 = vshrl.u32 %v1019, 16
      %v1090 = vrot.slane %v1088, 4
      %v1091 = vshll.u32 %v1019, 16
      %v1093 = vrot.slane %v1091, 5
      %v1094 = vor.u32 %v1090, %v1093
      %v1095 = vrot.slane %v1094, 4
      %v1097 = vshll.u32 %v1027, 16
      %v1099 = vrot.slane %v1097, 5
      %v1100 = vsel %vm658, %v1095, %v1099
      %v1102 = vshrl.u32 %v1020, 16
      %v1104 = vrot.slane %v1102, 4
      %v1105 = vshll.u32 %v1020, 16
      %v1107 = vrot.slane %v1105, 5
      %v1108 = vor.u32 %v1104, %v1107
      %v1109 = vrot.slane %v1108, 4
      %v1111 = vshll.u32 %v1028, 16
      %v1113 = vrot.slane %v1111, 5
      %v1114 = vsel %vm658, %v1109, %v1113
      %v1116 = vshrl.u32 %v1021, 16
      %v1118 = vrot.slane %v1116, 4
      %v1119 = vshll.u32 %v1021, 16
      %v1121 = vrot.slane %v1119, 5
      %v1122 = vor.u32 %v1118, %v1121
      %v1123 = vrot.slane %v1122, 4
      %v1125 = vshll.u32 %v1029, 16
      %v1127 = vrot.slane %v1125, 5
      %v1128 = vsel %vm658, %v1123, %v1127
      %v1130 = vshrl.u32 %v1022, 16
      %v1132 = vrot.slane %v1130, 4
      %v1133 = vshll.u32 %v1022, 16
      %v1135 = vrot.slane %v1133, 5
      %v1136 = vor.u32 %v1132, %v1135
      %v1137 = vrot.slane %v1136, 4
      %v1139 = vshll.u32 %v1030, 16
      %v1141 = vrot.slane %v1139, 5
      %v1142 = vsel %vm658, %v1137, %v1141
      %v1143 = vld [vmem:[%s1014] sm:$0xe]
      %v1144 = vld [vmem:[%s1014 + $0x8] sm:$0xe]
      %v1145 = vld [vmem:[%s1014 + $0x10] sm:$0xe]
      %v1146 = vld [vmem:[%s1014 + $0x18] sm:$0xe]
      %v1147 = vld [vmem:[%s1014 + $0x20] sm:$0xe]
      %v1148 = vld [vmem:[%s1014 + $0x28] sm:$0xe]
      %v1149 = vld [vmem:[%s1014 + $0x30] sm:$0xe]
      %v1150 = vld [vmem:[%s1014 + $0x38] sm:$0xe]
      %v1167 = vrot.slane %v1143, 5
      %v1168 = vrot.slane %v1167, 4
      %v1169 = vrot.slane %v1023, 5
      %v1170 = vsel %vm797, %v1168, %v1169
      %v1171 = vrot.slane %v1144, 5
      %v1172 = vrot.slane %v1171, 4
      %v1173 = vrot.slane %v1024, 5
      %v1174 = vsel %vm797, %v1172, %v1173
      %v1175 = vrot.slane %v1145, 5
      %v1176 = vrot.slane %v1175, 4
      %v1177 = vrot.slane %v1025, 5
      %v1178 = vsel %vm797, %v1176, %v1177
      %v1179 = vrot.slane %v1146, 5
      %v1180 = vrot.slane %v1179, 4
      %v1181 = vrot.slane %v1026, 5
      %v1182 = vsel %vm797, %v1180, %v1181
      %v1183 = vrot.slane %v1147, 5
      %v1184 = vrot.slane %v1183, 4
      %v1185 = vrot.slane %v1027, 5
      %v1186 = vsel %vm797, %v1184, %v1185
      %v1187 = vrot.slane %v1148, 5
      %v1188 = vrot.slane %v1187, 4
      %v1189 = vrot.slane %v1028, 5
      %v1190 = vsel %vm797, %v1188, %v1189
      %v1191 = vrot.slane %v1149, 5
      %v1192 = vrot.slane %v1191, 4
      %v1193 = vrot.slane %v1029, 5
      %v1194 = vsel %vm797, %v1192, %v1193
      %v1195 = vrot.slane %v1150, 5
      %v1196 = vrot.slane %v1195, 4
      %v1197 = vrot.slane %v1030, 5
      %v1198 = vsel %vm797, %v1196, %v1197
      %v1207 = vunpack.c.l.b16 %v640
      %v1208 = vunpack.c.l.b16 %v641
      %v1209 = vunpack.c.l.b16 %v642
      %v1210 = vunpack.c.l.b16 %v643
      %v1211 = vunpack.c.l.b16 %v644
      %v1212 = vunpack.c.l.b16 %v645
      %v1213 = vunpack.c.l.b16 %v646
      %v1214 = vunpack.c.l.b16 %v647
      %v1215 = vpack.c.b16 %v1208, %v1207
      %v1216 = vpack.c.b16 %v1210, %v1209
      %v1217 = vpack.c.b16 %v1212, %v1211
      %v1218 = vpack.c.b16 %v1214, %v1213
      %v1219 = vunpack.c.l.b16 %v672
      %v1220 = vunpack.c.l.b16 %v686
      %v1221 = vunpack.c.l.b16 %v700
      %v1222 = vunpack.c.l.b16 %v714
      %v1223 = vunpack.c.l.b16 %v728
      %v1224 = vunpack.c.l.b16 %v742
      %v1225 = vunpack.c.l.b16 %v756
      %v1226 = vunpack.c.l.b16 %v770
      %v1227 = vpack.c.b16 %v1220, %v1219
      %v1228 = vpack.c.b16 %v1222, %v1221
      %v1229 = vpack.c.b16 %v1224, %v1223
      %v1230 = vpack.c.b16 %v1226, %v1225
      %1231 = vrot.lane.b32.xlu0 %v1227, 4
      %v1232 = vpop.permute.xlu0 %1231
      %1233 = vrot.lane.b32.xlu0 %v1228, 4
      %v1234 = vpop.permute.xlu0 %1233
      %1235 = vrot.lane.b32.xlu0 %v1229, 4
      %v1236 = vpop.permute.xlu0 %1235
      %1237 = vrot.lane.b32.xlu0 %v1230, 4
      %v1238 = vpop.permute.xlu0 %1237
      %v1239 = vunpack.c.l.b16 %v801
      %v1240 = vunpack.c.l.b16 %v805
      %v1241 = vunpack.c.l.b16 %v809
      %v1242 = vunpack.c.l.b16 %v813
      %v1243 = vunpack.c.l.b16 %v817
      %v1244 = vunpack.c.l.b16 %v821
      %v1245 = vunpack.c.l.b16 %v825
      %v1246 = vunpack.c.l.b16 %v829
      %v1247 = vpack.c.b16 %v1240, %v1239
      %v1248 = vpack.c.b16 %v1242, %v1241
      %v1249 = vpack.c.b16 %v1244, %v1243
      %v1250 = vpack.c.b16 %v1246, %v1245
      %1251 = vrot.lane.b32.xlu0 %v1247, 8
      %v1252 = vpop.permute.xlu0 %1251
      %1253 = vrot.lane.b32.xlu0 %v1248, 8
      %v1254 = vpop.permute.xlu0 %1253
      %1255 = vrot.lane.b32.xlu0 %v1249, 8
      %v1256 = vpop.permute.xlu0 %1255
      %1257 = vrot.lane.b32.xlu0 %v1250, 8
      %v1258 = vpop.permute.xlu0 %1257
      %v1267 = vunpack.c.l.b16 %v830
      %v1268 = vunpack.c.l.b16 %v831
      %v1269 = vunpack.c.l.b16 %v832
      %v1270 = vunpack.c.l.b16 %v833
      %v1271 = vunpack.c.l.b16 %v834
      %v1272 = vunpack.c.l.b16 %v835
      %v1273 = vunpack.c.l.b16 %v836
      %v1274 = vunpack.c.l.b16 %v837
      %v1275 = vpack.c.b16 %v1268, %v1267
      %v1276 = vpack.c.b16 %v1270, %v1269
      %v1277 = vpack.c.b16 %v1272, %v1271
      %v1278 = vpack.c.b16 %v1274, %v1273
      %1279 = vrot.lane.b32.xlu0 %v1275, 12
      %v1280 = vpop.permute.xlu0 %1279
      %1281 = vrot.lane.b32.xlu0 %v1276, 12
      %v1282 = vpop.permute.xlu0 %1281
      %1283 = vrot.lane.b32.xlu0 %v1277, 12
      %v1284 = vpop.permute.xlu0 %1283
      %1285 = vrot.lane.b32.xlu0 %v1278, 12
      %v1286 = vpop.permute.xlu0 %1285
      %v1287 = vunpack.c.l.b16 %v859
      %v1288 = vunpack.c.l.b16 %v873
      %v1289 = vunpack.c.l.b16 %v887
      %v1290 = vunpack.c.l.b16 %v901
      %v1291 = vunpack.c.l.b16 %v915
      %v1292 = vunpack.c.l.b16 %v929
      %v1293 = vunpack.c.l.b16 %v943
      %v1294 = vunpack.c.l.b16 %v957
      %v1295 = vpack.c.b16 %v1288, %v1287
      %v1296 = vpack.c.b16 %v1290, %v1289
      %v1297 = vpack.c.b16 %v1292, %v1291
      %v1298 = vpack.c.b16 %v1294, %v1293
      %1299 = vrot.lane.b32.xlu0 %v1295, 16
      %v1300 = vpop.permute.xlu0 %1299
      %1301 = vrot.lane.b32.xlu0 %v1296, 16
      %v1302 = vpop.permute.xlu0 %1301
      %1303 = vrot.lane.b32.xlu0 %v1297, 16
      %v1304 = vpop.permute.xlu0 %1303
      %1305 = vrot.lane.b32.xlu0 %v1298, 16
      %v1306 = vpop.permute.xlu0 %1305
      %v1307 = vunpack.c.l.b16 %v985
      %v1308 = vunpack.c.l.b16 %v989
      %v1309 = vunpack.c.l.b16 %v993
      %v1310 = vunpack.c.l.b16 %v997
      %v1311 = vunpack.c.l.b16 %v1001
      %v1312 = vunpack.c.l.b16 %v1005
      %v1313 = vunpack.c.l.b16 %v1009
      %v1314 = vunpack.c.l.b16 %v1013
      %v1315 = vpack.c.b16 %v1308, %v1307
      %v1316 = vpack.c.b16 %v1310, %v1309
      %v1317 = vpack.c.b16 %v1312, %v1311
      %v1318 = vpack.c.b16 %v1314, %v1313
      %1319 = vrot.lane.b32.xlu0 %v1315, 20
      %v1320 = vpop.permute.xlu0 %1319
      %1321 = vrot.lane.b32.xlu0 %v1316, 20
      %v1322 = vpop.permute.xlu0 %1321
      %1323 = vrot.lane.b32.xlu0 %v1317, 20
      %v1324 = vpop.permute.xlu0 %1323
      %1325 = vrot.lane.b32.xlu0 %v1318, 20
      %v1326 = vpop.permute.xlu0 %1325
      %v1335 = vunpack.c.l.b16 %v1015
      %v1336 = vunpack.c.l.b16 %v1016
      %v1337 = vunpack.c.l.b16 %v1017
      %v1338 = vunpack.c.l.b16 %v1018
      %v1339 = vunpack.c.l.b16 %v1019
      %v1340 = vunpack.c.l.b16 %v1020
      %v1341 = vunpack.c.l.b16 %v1021
      %v1342 = vunpack.c.l.b16 %v1022
      %v1343 = vpack.c.b16 %v1336, %v1335
      %v1344 = vpack.c.b16 %v1338, %v1337
      %v1345 = vpack.c.b16 %v1340, %v1339
      %v1346 = vpack.c.b16 %v1342, %v1341
      %1347 = vrot.lane.b32.xlu0 %v1343, 24
      %v1348 = vpop.permute.xlu0 %1347
      %1349 = vrot.lane.b32.xlu0 %v1344, 24
      %v1350 = vpop.permute.xlu0 %1349
      %1351 = vrot.lane.b32.xlu0 %v1345, 24
      %v1352 = vpop.permute.xlu0 %1351
      %1353 = vrot.lane.b32.xlu0 %v1346, 24
      %v1354 = vpop.permute.xlu0 %1353
      %v1355 = vunpack.c.l.b16 %v1044
      %v1356 = vunpack.c.l.b16 %v1058
      %v1357 = vunpack.c.l.b16 %v1072
      %v1358 = vunpack.c.l.b16 %v1086
      %v1359 = vunpack.c.l.b16 %v1100
      %v1360 = vunpack.c.l.b16 %v1114
      %v1361 = vunpack.c.l.b16 %v1128
      %v1362 = vunpack.c.l.b16 %v1142
      %v1363 = vpack.c.b16 %v1356, %v1355
      %v1364 = vpack.c.b16 %v1358, %v1357
      %v1365 = vpack.c.b16 %v1360, %v1359
      %v1366 = vpack.c.b16 %v1362, %v1361
      %1367 = vrot.lane.b32.xlu0 %v1363, 28
      %v1368 = vpop.permute.xlu0 %1367
      %1369 = vrot.lane.b32.xlu0 %v1364, 28
      %v1370 = vpop.permute.xlu0 %1369
      %1371 = vrot.lane.b32.xlu0 %v1365, 28
      %v1372 = vpop.permute.xlu0 %1371
      %1373 = vrot.lane.b32.xlu0 %v1366, 28
      %v1374 = vpop.permute.xlu0 %1373
      %v1375 = vunpack.c.l.b16 %v1170
      %v1376 = vunpack.c.l.b16 %v1174
      %v1377 = vunpack.c.l.b16 %v1178
      %v1378 = vunpack.c.l.b16 %v1182
      %v1379 = vunpack.c.l.b16 %v1186
      %v1380 = vunpack.c.l.b16 %v1190
      %v1381 = vunpack.c.l.b16 %v1194
      %v1382 = vunpack.c.l.b16 %v1198
      %v1383 = vpack.c.b16 %v1376, %v1375
      %v1384 = vpack.c.b16 %v1378, %v1377
      %v1385 = vpack.c.b16 %v1380, %v1379
      %v1386 = vpack.c.b16 %v1382, %v1381
      %1387 = vrot.lane.b32.xlu0 %v1383, 32
      %v1388 = vpop.permute.xlu0 %1387
      %1389 = vrot.lane.b32.xlu0 %v1384, 32
      %v1390 = vpop.permute.xlu0 %1389
      %1391 = vrot.lane.b32.xlu0 %v1385, 32
      %v1392 = vpop.permute.xlu0 %1391
      %1393 = vrot.lane.b32.xlu0 %v1386, 32
      %v1394 = vpop.permute.xlu0 %1393
      %vm1395 = vcmask 31744
      %v1398 = vsel %vm1395, %v1215, %v1232
      %v1401 = vsel %vm1395, %v1216, %v1234
      %v1404 = vsel %vm1395, %v1217, %v1236
      %v1407 = vsel %vm1395, %v1218, %v1238
      %vm1408 = vcmask 64512
      %v1410 = vsel %vm1408, %v1398, %v1252
      %v1412 = vsel %vm1408, %v1401, %v1254
      %v1414 = vsel %vm1408, %v1404, %v1256
      %v1416 = vsel %vm1408, %v1407, %v1258
      %vm1417 = vcmask 97280
      %v1419 = vsel %vm1417, %v1410, %v1280
      %v1421 = vsel %vm1417, %v1412, %v1282
      %v1423 = vsel %vm1417, %v1414, %v1284
      %v1425 = vsel %vm1417, %v1416, %v1286
      %vm1426 = vcmask 130048
      %v1428 = vsel %vm1426, %v1419, %v1300
      %v1430 = vsel %vm1426, %v1421, %v1302
      %v1432 = vsel %vm1426, %v1423, %v1304
      %v1434 = vsel %vm1426, %v1425, %v1306
      %vm1435 = vcmask 162816
      %v1437 = vsel %vm1435, %v1428, %v1320
      %v1439 = vsel %vm1435, %v1430, %v1322
      %v1441 = vsel %vm1435, %v1432, %v1324
      %v1443 = vsel %vm1435, %v1434, %v1326
      %vm1444 = vcmask 195584
      %v1446 = vsel %vm1444, %v1437, %v1348
      %v1448 = vsel %vm1444, %v1439, %v1350
      %v1450 = vsel %vm1444, %v1441, %v1352
      %v1452 = vsel %vm1444, %v1443, %v1354
      %vm1453 = vcmask 228352
      %v1455 = vsel %vm1453, %v1446, %v1368
      %v1457 = vsel %vm1453, %v1448, %v1370
      %v1459 = vsel %vm1453, %v1450, %v1372
      %v1461 = vsel %vm1453, %v1452, %v1374
      %vm1462 = vcmask 261120
      %v1464 = vsel %vm1462, %v1455, %v1388
      %v1466 = vsel %vm1462, %v1457, %v1390
      %v1468 = vsel %vm1462, %v1459, %v1392
      %v1470 = vsel %vm1462, %v1461, %v1394
      %v1471 = vld [vmem:[%s1] sm:$0xf]
      %v1472 = vld [vmem:[%s1 + $0x4] sm:$0xf]
      %v1473 = vld [vmem:[%s1 + $0x8] sm:$0xf]
      %v1474 = vld [vmem:[%s1 + $0xc] sm:$0xf]
      %v1475 = vld [vmem:[%s1 + $0x10] sm:$0x3]
      %v1476 = vld [vmem:[%s2] sm:$0x1]
      %v1478 = vlaneseq
      %v1479 = vshrl.u32 %v1478, 7
      %v1480 = vsub.s32 0, %v1479
      %v1481 = vrot.slane %v1476, %v1480
      %v1488 = vunpack.c.l.b16 %v1471
      %v1489 = vunpack.c.l.b16 %v1472
      %v1490 = vunpack.c.l.b16 %v1473
      %v1491 = vunpack.c.l.b16 %v1474
      %v1492 = vunpack.c.l.b16 %v1475
      %v1493 = vpack.c.b16 %v1489, %v1488
      %v1494 = vpack.c.b16 %v1491, %v1490
      %v1495 = vpack.c.b16 %v1492, %v1492
      %vm1498 = vcmask 293888
      %v1499 = vsel %vm1498, %v1464, 0
      %v1501 = vsel %vm1498, %v1466, 0
      %v1503 = vsel %vm1498, %v1468, 0
      %v1505 = vsel %vm1498, %v1470, 0
      %vm1507 = vcmask 1041408
      %v1509 = vsel %vm1507, %v1495, 0
      %1511 = vmatprep.subr.bf16.mxu0 0
      %1512 = vmatpush1.bf16.msra.mxu0 %v1493
      %1513 = vmatprep.subr.bf16.mxu0 0
      %1514 = vmatpush1.bf16.msra.mxu0 %v1494
      %1515 = vmatprep.subr.bf16.mxu0 0
      %1516 = vmatpush1.bf16.msra.mxu0 %v1509
      %1517 = vmatprep.subr.bf16.mxu0 0
      %1518 = vmatpush1.bf16.msra.mxu0 0
      %1519 = vmatprep.subr.bf16.mxu0 0
      %1520 = vmatpush1.bf16.msra.mxu0 0
      %1521 = vmatprep.subr.bf16.mxu0 0
      %1522 = vmatpush1.bf16.msra.mxu0 0
      %1523 = vmatprep.subr.bf16.mxu0 0
      %1524 = vmatpush1.bf16.msra.mxu0 0
      %1525 = vmatprep.subr.bf16.mxu0 0
      %1526 = vmatpush1.bf16.msra.mxu0 0
      %1527 = vmatprep.subr.bf16.mxu0 0
      %1528 = vmatpush1.bf16.msra.mxu0 0
      %1529 = vmatprep.subr.bf16.mxu0 0
      %1530 = vmatpush1.bf16.msra.mxu0 0
      %1531 = vmatprep.subr.bf16.mxu0 0
      %1532 = vmatpush1.bf16.msra.mxu0 0
      %1533 = vmatprep.subr.bf16.mxu0 0
      %1534 = vmatpush1.bf16.msra.mxu0 0
      %1535 = vmatprep.subr.bf16.mxu0 0
      %1536 = vmatpush1.bf16.msra.mxu0 0
      %1537 = vmatprep.subr.bf16.mxu0 0
      %1538 = vmatpush1.bf16.msra.mxu0 0
      %1539 = vmatprep.subr.bf16.mxu0 0
      %1540 = vmatpush1.bf16.msra.mxu0 0
      %1541 = vmatprep.subr.bf16.mxu0 0
      %1542 = vmatpush1.bf16.msra.mxu0 0
      %1543 = vmatprep.mubr.bf16.mxu0 0
      %1544 = vmatmul.mubr.bf16.gmra.mrb[0].mxu0 %v1499
      %v1545 = vpop.f32.mrb[0].mxu0
      %v1546 = vadd.f32 %v1481, %v1545
      %v1547 = vpop.f32.mrb[0].mxu0
      %v1548 = vpop.f32.mrb[0].mxu0
      %v1549 = vadd.f32 %v1481, %v1548
      %v1550 = vpop.f32.mrb[0].mxu0
      %1551 = vmatprep.mubr.bf16.mxu0 0
      %1552 = vmatmul.mubr.bf16.gmra.mrb[0].mxu0 %v1501
      %v1553 = vpop.f32.mrb[0].mxu0
      %v1554 = vadd.f32 %v1481, %v1553
      %v1555 = vpop.f32.mrb[0].mxu0
      %v1556 = vpop.f32.mrb[0].mxu0
      %v1557 = vadd.f32 %v1481, %v1556
      %v1558 = vpop.f32.mrb[0].mxu0
      %1559 = vmatprep.mubr.bf16.mxu0 0
      %1560 = vmatmul.mubr.bf16.gmra.mrb[0].mxu0 %v1503
      %v1561 = vpop.f32.mrb[0].mxu0
      %v1562 = vadd.f32 %v1481, %v1561
      %v1563 = vpop.f32.mrb[0].mxu0
      %v1564 = vpop.f32.mrb[0].mxu0
      %v1565 = vadd.f32 %v1481, %v1564
      %v1566 = vpop.f32.mrb[0].mxu0
      %1567 = vmatprep.mubr.bf16.mxu0 0
      %1568 = vmatmul.mubr.bf16.gmra.mrb[0].mxu0 %v1505
      %v1569 = vpop.f32.mrb[0].mxu0
      %v1570 = vadd.f32 %v1481, %v1569
      %v1571 = vpop.f32.mrb[0].mxu0
      %v1572 = vpop.f32.mrb[0].mxu0
      %v1573 = vadd.f32 %v1481, %v1572
      %v1574 = vpop.f32.mrb[0].mxu0
      %1575 = vdwg.mxu0
      %1584 = vrot.lane.b32.xlu0 %v1546, 8
      %v1585 = vpop.permute.xlu0 %1584
      %1586 = vrot.lane.b32.xlu0 %v1549, 8
      %v1587 = vpop.permute.xlu0 %1586
      %1588 = vrot.lane.b32.xlu0 %v1554, 8
      %v1589 = vpop.permute.xlu0 %1588
      %1590 = vrot.lane.b32.xlu0 %v1557, 8
      %v1591 = vpop.permute.xlu0 %1590
      %1592 = vrot.lane.b32.xlu0 %v1562, 8
      %v1593 = vpop.permute.xlu0 %1592
      %1594 = vrot.lane.b32.xlu0 %v1565, 8
      %v1595 = vpop.permute.xlu0 %1594
      %1596 = vrot.lane.b32.xlu0 %v1570, 8
      %v1597 = vpop.permute.xlu0 %1596
      %1598 = vrot.lane.b32.xlu0 %v1573, 8
      %v1599 = vpop.permute.xlu0 %1598
      %v1608 = vadd.f32 %v1546, %v1585
      %v1609 = vadd.f32 %v1549, %v1587
      %v1610 = vadd.f32 %v1554, %v1589
      %v1611 = vadd.f32 %v1557, %v1591
      %v1612 = vadd.f32 %v1562, %v1593
      %v1613 = vadd.f32 %v1565, %v1595
      %v1614 = vadd.f32 %v1570, %v1597
      %v1615 = vadd.f32 %v1573, %v1599
      %v1616 = vmax.f32 %v1608, 0.0
      %v1617 = vmax.f32 %v1609, 0.0
      %v1618 = vmax.f32 %v1610, 0.0
      %v1619 = vmax.f32 %v1611, 0.0
      %v1620 = vmax.f32 %v1612, 0.0
      %v1621 = vmax.f32 %v1613, 0.0
      %v1622 = vmax.f32 %v1614, 0.0
      %v1623 = vmax.f32 %v1615, 0.0
      %v1624 = vpack.c.bf16 %v1617, %v1616
      %v1625 = vpack.c.bf16 %v1619, %v1618
      %v1626 = vpack.c.bf16 %v1621, %v1620
      %v1627 = vpack.c.bf16 %v1623, %v1622
      %v1632 = vunpack.c.l.b16 %v1624
      %v1633 = vunpack.c.h.b16 %v1624
      %v1634 = vunpack.c.l.b16 %v1625
      %v1635 = vunpack.c.h.b16 %v1625
      %v1636 = vunpack.c.l.b16 %v1626
      %v1637 = vunpack.c.h.b16 %v1626
      %v1638 = vunpack.c.l.b16 %v1627
      %v1639 = vunpack.c.h.b16 %v1627
      %v1640 = vpack.c.b16 %v1632, %v1632
      %v1641 = vpack.c.b16 %v1633, %v1633
      %v1642 = vpack.c.b16 %v1634, %v1634
      %v1643 = vpack.c.b16 %v1635, %v1635
      %v1644 = vpack.c.b16 %v1636, %v1636
      %v1645 = vpack.c.b16 %v1637, %v1637
      %v1646 = vpack.c.b16 %v1638, %v1638
      %v1647 = vpack.c.b16 %v1639, %v1639
      %v1649 = vshrl.u32 %v1640, 16
      %v1651 = vrot.slane %v1649, 7
      %v1652 = vshll.u32 %v1640, 16
      %v1654 = vor.u32 %v1651, %v1652
      %v1655 = vrot.slane %v1651, 4
      %v1657 = vshrl.u32 %v1641, 16
      %v1659 = vrot.slane %v1657, 7
      %v1660 = vshll.u32 %v1641, 16
      %v1662 = vor.u32 %v1659, %v1660
      %v1663 = vrot.slane %v1659, 4
      %v1665 = vshrl.u32 %v1642, 16
      %v1667 = vrot.slane %v1665, 7
      %v1668 = vshll.u32 %v1642, 16
      %v1670 = vor.u32 %v1667, %v1668
      %v1671 = vrot.slane %v1667, 4
      %v1673 = vshrl.u32 %v1643, 16
      %v1675 = vrot.slane %v1673, 7
      %v1676 = vshll.u32 %v1643, 16
      %v1678 = vor.u32 %v1675, %v1676
      %v1679 = vrot.slane %v1675, 4
      %v1681 = vshrl.u32 %v1644, 16
      %v1683 = vrot.slane %v1681, 7
      %v1684 = vshll.u32 %v1644, 16
      %v1686 = vor.u32 %v1683, %v1684
      %v1687 = vrot.slane %v1683, 4
      %v1689 = vshrl.u32 %v1645, 16
      %v1691 = vrot.slane %v1689, 7
      %v1692 = vshll.u32 %v1645, 16
      %v1694 = vor.u32 %v1691, %v1692
      %v1695 = vrot.slane %v1691, 4
      %v1697 = vshrl.u32 %v1646, 16
      %v1699 = vrot.slane %v1697, 7
      %v1700 = vshll.u32 %v1646, 16
      %v1702 = vor.u32 %v1699, %v1700
      %v1703 = vrot.slane %v1699, 4
      %v1705 = vshrl.u32 %v1647, 16
      %v1707 = vrot.slane %v1705, 7
      %v1708 = vshll.u32 %v1647, 16
      %v1710 = vor.u32 %v1707, %v1708
      %v1711 = vrot.slane %v1707, 4
      %1712 = vrot.lane.b32.xlu0 %v1654, 120
      %v1713 = vpop.permute.xlu0 %1712
      %1714 = vrot.lane.b32.xlu0 %v1655, 120
      %v1715 = vpop.permute.xlu0 %1714
      %1716 = vrot.lane.b32.xlu0 %v1662, 120
      %v1717 = vpop.permute.xlu0 %1716
      %1718 = vrot.lane.b32.xlu0 %v1663, 120
      %v1719 = vpop.permute.xlu0 %1718
      %1720 = vrot.lane.b32.xlu0 %v1670, 120
      %v1721 = vpop.permute.xlu0 %1720
      %1722 = vrot.lane.b32.xlu0 %v1671, 120
      %v1723 = vpop.permute.xlu0 %1722
      %1724 = vrot.lane.b32.xlu0 %v1678, 120
      %v1725 = vpop.permute.xlu0 %1724
      %1726 = vrot.lane.b32.xlu0 %v1679, 120
      %v1727 = vpop.permute.xlu0 %1726
      %1728 = vrot.lane.b32.xlu0 %v1686, 120
      %v1729 = vpop.permute.xlu0 %1728
      %1730 = vrot.lane.b32.xlu0 %v1687, 120
      %v1731 = vpop.permute.xlu0 %1730
      %1732 = vrot.lane.b32.xlu0 %v1694, 120
      %v1733 = vpop.permute.xlu0 %1732
      %1734 = vrot.lane.b32.xlu0 %v1695, 120
      %v1735 = vpop.permute.xlu0 %1734
      %1736 = vrot.lane.b32.xlu0 %v1702, 120
      %v1737 = vpop.permute.xlu0 %1736
      %1738 = vrot.lane.b32.xlu0 %v1703, 120
      %v1739 = vpop.permute.xlu0 %1738
      %1740 = vrot.lane.b32.xlu0 %v1710, 120
      %v1741 = vpop.permute.xlu0 %1740
      %1742 = vrot.lane.b32.xlu0 %v1711, 120
      %v1743 = vpop.permute.xlu0 %1742
      %s1760 = scalar_lea.vmem [#allocation3], 8
      %vm1761 = vcmask 60416
      %vm1762 = vmand %vm1761, %vm587
      %v1763 = vld [vmem:[%s1760] sm:$0xf]
      %v1764 = vsel %vm1762, %v1713, %v1763
      %1765 = vst [vmem:[%s1760] sm:$0xf] %v1764
      %vm1766 = vcmask 57344
      %vm1767 = vmand %vm1766, %vm593
      %v1768 = vld [vmem:[%s1760 + $0x4] sm:$0x1]
      %v1769 = vsel %vm1767, %v1715, %v1768
      %1770 = vst [vmem:[%s1760 + $0x4] sm:$0x1] %v1769
      %v1771 = vld [vmem:[%s1760 + $0x8] sm:$0xf]
      %v1772 = vsel %vm1762, %v1717, %v1771
      %1773 = vst [vmem:[%s1760 + $0x8] sm:$0xf] %v1772
      %v1774 = vld [vmem:[%s1760 + $0xc] sm:$0x1]
      %v1775 = vsel %vm1767, %v1719, %v1774
      %1776 = vst [vmem:[%s1760 + $0xc] sm:$0x1] %v1775
      %v1777 = vld [vmem:[%s1760 + $0x10] sm:$0xf]
      %v1778 = vsel %vm1762, %v1721, %v1777
      %1779 = vst [vmem:[%s1760 + $0x10] sm:$0xf] %v1778
      %v1780 = vld [vmem:[%s1760 + $0x14] sm:$0x1]
      %v1781 = vsel %vm1767, %v1723, %v1780
      %1782 = vst [vmem:[%s1760 + $0x14] sm:$0x1] %v1781
      %v1783 = vld [vmem:[%s1760 + $0x18] sm:$0xf]
      %v1784 = vsel %vm1762, %v1725, %v1783
      %1785 = vst [vmem:[%s1760 + $0x18] sm:$0xf] %v1784
      %v1786 = vld [vmem:[%s1760 + $0x1c] sm:$0x1]
      %v1787 = vsel %vm1767, %v1727, %v1786
      %1788 = vst [vmem:[%s1760 + $0x1c] sm:$0x1] %v1787
      %v1789 = vld [vmem:[%s1760 + $0x20] sm:$0xf]
      %v1790 = vsel %vm1762, %v1729, %v1789
      %1791 = vst [vmem:[%s1760 + $0x20] sm:$0xf] %v1790
      %v1792 = vld [vmem:[%s1760 + $0x24] sm:$0x1]
      %v1793 = vsel %vm1767, %v1731, %v1792
      %1794 = vst [vmem:[%s1760 + $0x24] sm:$0x1] %v1793
      %v1795 = vld [vmem:[%s1760 + $0x28] sm:$0xf]
      %v1796 = vsel %vm1762, %v1733, %v1795
      %1797 = vst [vmem:[%s1760 + $0x28] sm:$0xf] %v1796
      %v1798 = vld [vmem:[%s1760 + $0x2c] sm:$0x1]
      %v1799 = vsel %vm1767, %v1735, %v1798
      %1800 = vst [vmem:[%s1760 + $0x2c] sm:$0x1] %v1799
      %v1801 = vld [vmem:[%s1760 + $0x30] sm:$0xf]
      %v1802 = vsel %vm1762, %v1737, %v1801
      %1803 = vst [vmem:[%s1760 + $0x30] sm:$0xf] %v1802
      %v1804 = vld [vmem:[%s1760 + $0x34] sm:$0x1]
      %v1805 = vsel %vm1767, %v1739, %v1804
      %1806 = vst [vmem:[%s1760 + $0x34] sm:$0x1] %v1805
      %v1807 = vld [vmem:[%s1760 + $0x38] sm:$0xf]
      %v1808 = vsel %vm1762, %v1741, %v1807
      %1809 = vst [vmem:[%s1760 + $0x38] sm:$0xf] %v1808
      %v1810 = vld [vmem:[%s1760 + $0x3c] sm:$0x1]
      %v1811 = vsel %vm1767, %v1743, %v1810
      %1812 = vst [vmem:[%s1760 + $0x3c] sm:$0x1] %v1811
      %v1813 = vld [vmem:[#allocation3] sm:$0xf]
      %v1814 = vld [vmem:[#allocation3 + $0x8] sm:$0xf]
      %v1815 = vld [vmem:[#allocation3 + $0x10] sm:$0xf]
      %v1816 = vld [vmem:[#allocation3 + $0x18] sm:$0xf]
      %v1817 = vld [vmem:[#allocation3 + $0x20] sm:$0xf]
      %v1818 = vld [vmem:[#allocation3 + $0x28] sm:$0xf]
      %v1819 = vld [vmem:[#allocation3 + $0x30] sm:$0xf]
      %v1820 = vld [vmem:[#allocation3 + $0x38] sm:$0xf]
      %v1821 = vld [vmem:[#allocation3 + $0x4] sm:$0x1]
      %v1822 = vld [vmem:[#allocation3 + $0xc] sm:$0x1]
      %v1823 = vld [vmem:[#allocation3 + $0x14] sm:$0x1]
      %v1824 = vld [vmem:[#allocation3 + $0x1c] sm:$0x1]
      %v1825 = vld [vmem:[#allocation3 + $0x24] sm:$0x1]
      %v1826 = vld [vmem:[#allocation3 + $0x2c] sm:$0x1]
      %v1827 = vld [vmem:[#allocation3 + $0x34] sm:$0x1]
      %v1828 = vld [vmem:[#allocation3 + $0x3c] sm:$0x1]
      %v1830 = vshrl.u32 %v1813, 16
      %v1832 = vrot.slane %v1830, 4
      %v1833 = vshll.u32 %v1813, 16
      %v1835 = vrot.slane %v1833, 5
      %v1836 = vor.u32 %v1832, %v1835
      %v1837 = vrot.slane %v1836, 4
      %v1839 = vshll.u32 %v1821, 16
      %v1841 = vrot.slane %v1839, 5
      %v1842 = vsel %vm658, %v1837, %v1841
      %v1844 = vshrl.u32 %v1814, 16
      %v1846 = vrot.slane %v1844, 4
      %v1847 = vshll.u32 %v1814, 16
      %v1849 = vrot.slane %v1847, 5
      %v1850 = vor.u32 %v1846, %v1849
      %v1851 = vrot.slane %v1850, 4
      %v1853 = vshll.u32 %v1822, 16
      %v1855 = vrot.slane %v1853, 5
      %v1856 = vsel %vm658, %v1851, %v1855
      %v1858 = vshrl.u32 %v1815, 16
      %v1860 = vrot.slane %v1858, 4
      %v1861 = vshll.u32 %v1815, 16
      %v1863 = vrot.slane %v1861, 5
      %v1864 = vor.u32 %v1860, %v1863
      %v1865 = vrot.slane %v1864, 4
      %v1867 = vshll.u32 %v1823, 16
      %v1869 = vrot.slane %v1867, 5
      %v1870 = vsel %vm658, %v1865, %v1869
      %v1872 = vshrl.u32 %v1816, 16
      %v1874 = vrot.slane %v1872, 4
      %v1875 = vshll.u32 %v1816, 16
      %v1877 = vrot.slane %v1875, 5
      %v1878 = vor.u32 %v1874, %v1877
      %v1879 = vrot.slane %v1878, 4
      %v1881 = vshll.u32 %v1824, 16
      %v1883 = vrot.slane %v1881, 5
      %v1884 = vsel %vm658, %v1879, %v1883
      %v1886 = vshrl.u32 %v1817, 16
      %v1888 = vrot.slane %v1886, 4
      %v1889 = vshll.u32 %v1817, 16
      %v1891 = vrot.slane %v1889, 5
      %v1892 = vor.u32 %v1888, %v1891
      %v1893 = vrot.slane %v1892, 4
      %v1895 = vshll.u32 %v1825, 16
      %v1897 = vrot.slane %v1895, 5
      %v1898 = vsel %vm658, %v1893, %v1897
      %v1900 = vshrl.u32 %v1818, 16
      %v1902 = vrot.slane %v1900, 4
      %v1903 = vshll.u32 %v1818, 16
      %v1905 = vrot.slane %v1903, 5
      %v1906 = vor.u32 %v1902, %v1905
      %v1907 = vrot.slane %v1906, 4
      %v1909 = vshll.u32 %v1826, 16
      %v1911 = vrot.slane %v1909, 5
      %v1912 = vsel %vm658, %v1907, %v1911
      %v1914 = vshrl.u32 %v1819, 16
      %v1916 = vrot.slane %v1914, 4
      %v1917 = vshll.u32 %v1819, 16
      %v1919 = vrot.slane %v1917, 5
      %v1920 = vor.u32 %v1916, %v1919
      %v1921 = vrot.slane %v1920, 4
      %v1923 = vshll.u32 %v1827, 16
      %v1925 = vrot.slane %v1923, 5
      %v1926 = vsel %vm658, %v1921, %v1925
      %v1928 = vshrl.u32 %v1820, 16
      %v1930 = vrot.slane %v1928, 4
      %v1931 = vshll.u32 %v1820, 16
      %v1933 = vrot.slane %v1931, 5
      %v1934 = vor.u32 %v1930, %v1933
      %v1935 = vrot.slane %v1934, 4
      %v1937 = vshll.u32 %v1828, 16
      %v1939 = vrot.slane %v1937, 5
      %v1940 = vsel %vm658, %v1935, %v1939
      %v1941 = vld [vmem:[#allocation3] sm:$0xe]
      %v1942 = vld [vmem:[#allocation3 + $0x8] sm:$0xe]
      %v1943 = vld [vmem:[#allocation3 + $0x10] sm:$0xe]
      %v1944 = vld [vmem:[#allocation3 + $0x18] sm:$0xe]
      %v1945 = vld [vmem:[#allocation3 + $0x20] sm:$0xe]
      %v1946 = vld [vmem:[#allocation3 + $0x28] sm:$0xe]
      %v1947 = vld [vmem:[#allocation3 + $0x30] sm:$0xe]
      %v1948 = vld [vmem:[#allocation3 + $0x38] sm:$0xe]
      %v1965 = vrot.slane %v1941, 5
      %v1966 = vrot.slane %v1965, 4
      %v1967 = vrot.slane %v1821, 5
      %v1968 = vsel %vm797, %v1966, %v1967
      %v1969 = vrot.slane %v1942, 5
      %v1970 = vrot.slane %v1969, 4
      %v1971 = vrot.slane %v1822, 5
      %v1972 = vsel %vm797, %v1970, %v1971
      %v1973 = vrot.slane %v1943, 5
      %v1974 = vrot.slane %v1973, 4
      %v1975 = vrot.slane %v1823, 5
      %v1976 = vsel %vm797, %v1974, %v1975
      %v1977 = vrot.slane %v1944, 5
      %v1978 = vrot.slane %v1977, 4
      %v1979 = vrot.slane %v1824, 5
      %v1980 = vsel %vm797, %v1978, %v1979
      %v1981 = vrot.slane %v1945, 5
      %v1982 = vrot.slane %v1981, 4
      %v1983 = vrot.slane %v1825, 5
      %v1984 = vsel %vm797, %v1982, %v1983
      %v1985 = vrot.slane %v1946, 5
      %v1986 = vrot.slane %v1985, 4
      %v1987 = vrot.slane %v1826, 5
      %v1988 = vsel %vm797, %v1986, %v1987
      %v1989 = vrot.slane %v1947, 5
      %v1990 = vrot.slane %v1989, 4
      %v1991 = vrot.slane %v1827, 5
      %v1992 = vsel %vm797, %v1990, %v1991
      %v1993 = vrot.slane %v1948, 5
      %v1994 = vrot.slane %v1993, 4
      %v1995 = vrot.slane %v1828, 5
      %v1996 = vsel %vm797, %v1994, %v1995
      %v1997 = vld [vmem:[%s1760] sm:$0xf]
      %v1998 = vld [vmem:[%s1760 + $0x8] sm:$0xf]
      %v1999 = vld [vmem:[%s1760 + $0x10] sm:$0xf]
      %v2000 = vld [vmem:[%s1760 + $0x18] sm:$0xf]
      %v2001 = vld [vmem:[%s1760 + $0x20] sm:$0xf]
      %v2002 = vld [vmem:[%s1760 + $0x28] sm:$0xf]
      %v2003 = vld [vmem:[%s1760 + $0x30] sm:$0xf]
      %v2004 = vld [vmem:[%s1760 + $0x38] sm:$0xf]
      %v2005 = vld [vmem:[%s1760 + $0x4] sm:$0x1]
      %v2006 = vld [vmem:[%s1760 + $0xc] sm:$0x1]
      %v2007 = vld [vmem:[%s1760 + $0x14] sm:$0x1]
      %v2008 = vld [vmem:[%s1760 + $0x1c] sm:$0x1]
      %v2009 = vld [vmem:[%s1760 + $0x24] sm:$0x1]
      %v2010 = vld [vmem:[%s1760 + $0x2c] sm:$0x1]
      %v2011 = vld [vmem:[%s1760 + $0x34] sm:$0x1]
      %v2012 = vld [vmem:[%s1760 + $0x3c] sm:$0x1]
      %v2014 = vshrl.u32 %v1997, 16
      %v2016 = vrot.slane %v2014, 4
      %v2017 = vshll.u32 %v1997, 16
      %v2019 = vrot.slane %v2017, 5
      %v2020 = vor.u32 %v2016, %v2019
      %v2021 = vrot.slane %v2020, 4
      %v2023 = vshll.u32 %v2005, 16
      %v2025 = vrot.slane %v2023, 5
      %v2026 = vsel %vm658, %v2021, %v2025
      %v2028 = vshrl.u32 %v1998, 16
      %v2030 = vrot.slane %v2028, 4
      %v2031 = vshll.u32 %v1998, 16
      %v2033 = vrot.slane %v2031, 5
      %v2034 = vor.u32 %v2030, %v2033
      %v2035 = vrot.slane %v2034, 4
      %v2037 = vshll.u32 %v2006, 16
      %v2039 = vrot.slane %v2037, 5
      %v2040 = vsel %vm658, %v2035, %v2039
      %v2042 = vshrl.u32 %v1999, 16
      %v2044 = vrot.slane %v2042, 4
      %v2045 = vshll.u32 %v1999, 16
      %v2047 = vrot.slane %v2045, 5
      %v2048 = vor.u32 %v2044, %v2047
      %v2049 = vrot.slane %v2048, 4
      %v2051 = vshll.u32 %v2007, 16
      %v2053 = vrot.slane %v2051, 5
      %v2054 = vsel %vm658, %v2049, %v2053
      %v2056 = vshrl.u32 %v2000, 16
      %v2058 = vrot.slane %v2056, 4
      %v2059 = vshll.u32 %v2000, 16
      %v2061 = vrot.slane %v2059, 5
      %v2062 = vor.u32 %v2058, %v2061
      %v2063 = vrot.slane %v2062, 4
      %v2065 = vshll.u32 %v2008, 16
      %v2067 = vrot.slane %v2065, 5
      %v2068 = vsel %vm658, %v2063, %v2067
      %v2070 = vshrl.u32 %v2001, 16
      %v2072 = vrot.slane %v2070, 4
      %v2073 = vshll.u32 %v2001, 16
      %v2075 = vrot.slane %v2073, 5
      %v2076 = vor.u32 %v2072, %v2075
      %v2077 = vrot.slane %v2076, 4
      %v2079 = vshll.u32 %v2009, 16
      %v2081 = vrot.slane %v2079, 5
      %v2082 = vsel %vm658, %v2077, %v2081
      %v2084 = vshrl.u32 %v2002, 16
      %v2086 = vrot.slane %v2084, 4
      %v2087 = vshll.u32 %v2002, 16
      %v2089 = vrot.slane %v2087, 5
      %v2090 = vor.u32 %v2086, %v2089
      %v2091 = vrot.slane %v2090, 4
      %v2093 = vshll.u32 %v2010, 16
      %v2095 = vrot.slane %v2093, 5
      %v2096 = vsel %vm658, %v2091, %v2095
      %v2098 = vshrl.u32 %v2003, 16
      %v2100 = vrot.slane %v2098, 4
      %v2101 = vshll.u32 %v2003, 16
      %v2103 = vrot.slane %v2101, 5
      %v2104 = vor.u32 %v2100, %v2103
      %v2105 = vrot.slane %v2104, 4
      %v2107 = vshll.u32 %v2011, 16
      %v2109 = vrot.slane %v2107, 5
      %v2110 = vsel %vm658, %v2105, %v2109
      %v2112 = vshrl.u32 %v2004, 16
      %v2114 = vrot.slane %v2112, 4
      %v2115 = vshll.u32 %v2004, 16
      %v2117 = vrot.slane %v2115, 5
      %v2118 = vor.u32 %v2114, %v2117
      %v2119 = vrot.slane %v2118, 4
      %v2121 = vshll.u32 %v2012, 16
      %v2123 = vrot.slane %v2121, 5
      %v2124 = vsel %vm658, %v2119, %v2123
      %v2125 = vld [vmem:[%s1760] sm:$0xe]
      %v2126 = vld [vmem:[%s1760 + $0x8] sm:$0xe]
      %v2127 = vld [vmem:[%s1760 + $0x10] sm:$0xe]
      %v2128 = vld [vmem:[%s1760 + $0x18] sm:$0xe]
      %v2129 = vld [vmem:[%s1760 + $0x20] sm:$0xe]
      %v2130 = vld [vmem:[%s1760 + $0x28] sm:$0xe]
      %v2131 = vld [vmem:[%s1760 + $0x30] sm:$0xe]
      %v2132 = vld [vmem:[%s1760 + $0x38] sm:$0xe]
      %v2149 = vrot.slane %v2125, 5
      %v2150 = vrot.slane %v2149, 4
      %v2151 = vrot.slane %v2005, 5
      %v2152 = vsel %vm797, %v2150, %v2151
      %v2153 = vrot.slane %v2126, 5
      %v2154 = vrot.slane %v2153, 4
      %v2155 = vrot.slane %v2006, 5
      %v2156 = vsel %vm797, %v2154, %v2155
      %v2157 = vrot.slane %v2127, 5
      %v2158 = vrot.slane %v2157, 4
      %v2159 = vrot.slane %v2007, 5
      %v2160 = vsel %vm797, %v2158, %v2159
      %v2161 = vrot.slane %v2128, 5
      %v2162 = vrot.slane %v2161, 4
      %v2163 = vrot.slane %v2008, 5
      %v2164 = vsel %vm797, %v2162, %v2163
      %v2165 = vrot.slane %v2129, 5
      %v2166 = vrot.slane %v2165, 4
      %v2167 = vrot.slane %v2009, 5
      %v2168 = vsel %vm797, %v2166, %v2167
      %v2169 = vrot.slane %v2130, 5
      %v2170 = vrot.slane %v2169, 4
      %v2171 = vrot.slane %v2010, 5
      %v2172 = vsel %vm797, %v2170, %v2171
      %v2173 = vrot.slane %v2131, 5
      %v2174 = vrot.slane %v2173, 4
      %v2175 = vrot.slane %v2011, 5
      %v2176 = vsel %vm797, %v2174, %v2175
      %v2177 = vrot.slane %v2132, 5
      %v2178 = vrot.slane %v2177, 4
      %v2179 = vrot.slane %v2012, 5
      %v2180 = vsel %vm797, %v2178, %v2179
      %s2181 = scalar_lea.vmem [#allocation3], 16
      %v2182 = vld [vmem:[%s2181] sm:$0xf]
      %v2183 = vld [vmem:[%s2181 + $0x8] sm:$0xf]
      %v2184 = vld [vmem:[%s2181 + $0x10] sm:$0xf]
      %v2185 = vld [vmem:[%s2181 + $0x18] sm:$0xf]
      %v2186 = vld [vmem:[%s2181 + $0x20] sm:$0xf]
      %v2187 = vld [vmem:[%s2181 + $0x28] sm:$0xf]
      %v2188 = vld [vmem:[%s2181 + $0x30] sm:$0xf]
      %v2189 = vld [vmem:[%s2181 + $0x38] sm:$0xf]
      %v2190 = vld [vmem:[%s2181 + $0x4] sm:$0x1]
      %v2191 = vld [vmem:[%s2181 + $0xc] sm:$0x1]
      %v2192 = vld [vmem:[%s2181 + $0x14] sm:$0x1]
      %v2193 = vld [vmem:[%s2181 + $0x1c] sm:$0x1]
      %v2194 = vld [vmem:[%s2181 + $0x24] sm:$0x1]
      %v2195 = vld [vmem:[%s2181 + $0x2c] sm:$0x1]
      %v2196 = vld [vmem:[%s2181 + $0x34] sm:$0x1]
      %v2197 = vld [vmem:[%s2181 + $0x3c] sm:$0x1]
      %v2199 = vshrl.u32 %v2182, 16
      %v2201 = vrot.slane %v2199, 4
      %v2202 = vshll.u32 %v2182, 16
      %v2204 = vrot.slane %v2202, 5
      %v2205 = vor.u32 %v2201, %v2204
      %v2206 = vrot.slane %v2205, 4
      %v2208 = vshll.u32 %v2190, 16
      %v2210 = vrot.slane %v2208, 5
      %v2211 = vsel %vm658, %v2206, %v2210
      %v2213 = vshrl.u32 %v2183, 16
      %v2215 = vrot.slane %v2213, 4
      %v2216 = vshll.u32 %v2183, 16
      %v2218 = vrot.slane %v2216, 5
      %v2219 = vor.u32 %v2215, %v2218
      %v2220 = vrot.slane %v2219, 4
      %v2222 = vshll.u32 %v2191, 16
      %v2224 = vrot.slane %v2222, 5
      %v2225 = vsel %vm658, %v2220, %v2224
      %v2227 = vshrl.u32 %v2184, 16
      %v2229 = vrot.slane %v2227, 4
      %v2230 = vshll.u32 %v2184, 16
      %v2232 = vrot.slane %v2230, 5
      %v2233 = vor.u32 %v2229, %v2232
      %v2234 = vrot.slane %v2233, 4
      %v2236 = vshll.u32 %v2192, 16
      %v2238 = vrot.slane %v2236, 5
      %v2239 = vsel %vm658, %v2234, %v2238
      %v2241 = vshrl.u32 %v2185, 16
      %v2243 = vrot.slane %v2241, 4
      %v2244 = vshll.u32 %v2185, 16
      %v2246 = vrot.slane %v2244, 5
      %v2247 = vor.u32 %v2243, %v2246
      %v2248 = vrot.slane %v2247, 4
      %v2250 = vshll.u32 %v2193, 16
      %v2252 = vrot.slane %v2250, 5
      %v2253 = vsel %vm658, %v2248, %v2252
      %v2255 = vshrl.u32 %v2186, 16
      %v2257 = vrot.slane %v2255, 4
      %v2258 = vshll.u32 %v2186, 16
      %v2260 = vrot.slane %v2258, 5
      %v2261 = vor.u32 %v2257, %v2260
      %v2262 = vrot.slane %v2261, 4
      %v2264 = vshll.u32 %v2194, 16
      %v2266 = vrot.slane %v2264, 5
      %v2267 = vsel %vm658, %v2262, %v2266
      %v2269 = vshrl.u32 %v2187, 16
      %v2271 = vrot.slane %v2269, 4
      %v2272 = vshll.u32 %v2187, 16
      %v2274 = vrot.slane %v2272, 5
      %v2275 = vor.u32 %v2271, %v2274
      %v2276 = vrot.slane %v2275, 4
      %v2278 = vshll.u32 %v2195, 16
      %v2280 = vrot.slane %v2278, 5
      %v2281 = vsel %vm658, %v2276, %v2280
      %v2283 = vshrl.u32 %v2188, 16
      %v2285 = vrot.slane %v2283, 4
      %v2286 = vshll.u32 %v2188, 16
      %v2288 = vrot.slane %v2286, 5
      %v2289 = vor.u32 %v2285, %v2288
      %v2290 = vrot.slane %v2289, 4
      %v2292 = vshll.u32 %v2196, 16
      %v2294 = vrot.slane %v2292, 5
      %v2295 = vsel %vm658, %v2290, %v2294
      %v2297 = vshrl.u32 %v2189, 16
      %v2299 = vrot.slane %v2297, 4
      %v2300 = vshll.u32 %v2189, 16
      %v2302 = vrot.slane %v2300, 5
      %v2303 = vor.u32 %v2299, %v2302
      %v2304 = vrot.slane %v2303, 4
      %v2306 = vshll.u32 %v2197, 16
      %v2308 = vrot.slane %v2306, 5
      %v2309 = vsel %vm658, %v2304, %v2308
      %v2310 = vld [vmem:[%s2181] sm:$0xe]
      %v2311 = vld [vmem:[%s2181 + $0x8] sm:$0xe]
      %v2312 = vld [vmem:[%s2181 + $0x10] sm:$0xe]
      %v2313 = vld [vmem:[%s2181 + $0x18] sm:$0xe]
      %v2314 = vld [vmem:[%s2181 + $0x20] sm:$0xe]
      %v2315 = vld [vmem:[%s2181 + $0x28] sm:$0xe]
      %v2316 = vld [vmem:[%s2181 + $0x30] sm:$0xe]
      %v2317 = vld [vmem:[%s2181 + $0x38] sm:$0xe]
      %v2334 = vrot.slane %v2310, 5
      %v2335 = vrot.slane %v2334, 4
      %v2336 = vrot.slane %v2190, 5
      %v2337 = vsel %vm797, %v2335, %v2336
      %v2338 = vrot.slane %v2311, 5
      %v2339 = vrot.slane %v2338, 4
      %v2340 = vrot.slane %v2191, 5
      %v2341 = vsel %vm797, %v2339, %v2340
      %v2342 = vrot.slane %v2312, 5
      %v2343 = vrot.slane %v2342, 4
      %v2344 = vrot.slane %v2192, 5
      %v2345 = vsel %vm797, %v2343, %v2344
      %v2346 = vrot.slane %v2313, 5
      %v2347 = vrot.slane %v2346, 4
      %v2348 = vrot.slane %v2193, 5
      %v2349 = vsel %vm797, %v2347, %v2348
      %v2350 = vrot.slane %v2314, 5
      %v2351 = vrot.slane %v2350, 4
      %v2352 = vrot.slane %v2194, 5
      %v2353 = vsel %vm797, %v2351, %v2352
      %v2354 = vrot.slane %v2315, 5
      %v2355 = vrot.slane %v2354, 4
      %v2356 = vrot.slane %v2195, 5
      %v2357 = vsel %vm797, %v2355, %v2356
      %v2358 = vrot.slane %v2316, 5
      %v2359 = vrot.slane %v2358, 4
      %v2360 = vrot.slane %v2196, 5
      %v2361 = vsel %vm797, %v2359, %v2360
      %v2362 = vrot.slane %v2317, 5
      %v2363 = vrot.slane %v2362, 4
      %v2364 = vrot.slane %v2197, 5
      %v2365 = vsel %vm797, %v2363, %v2364
      %v2374 = vunpack.c.l.b16 %v1813
      %v2375 = vunpack.c.l.b16 %v1814
      %v2376 = vunpack.c.l.b16 %v1815
      %v2377 = vunpack.c.l.b16 %v1816
      %v2378 = vunpack.c.l.b16 %v1817
      %v2379 = vunpack.c.l.b16 %v1818
      %v2380 = vunpack.c.l.b16 %v1819
      %v2381 = vunpack.c.l.b16 %v1820
      %v2382 = vpack.c.b16 %v2375, %v2374
      %v2383 = vpack.c.b16 %v2377, %v2376
      %v2384 = vpack.c.b16 %v2379, %v2378
      %v2385 = vpack.c.b16 %v2381, %v2380
      %v2386 = vunpack.c.l.b16 %v1842
      %v2387 = vunpack.c.l.b16 %v1856
      %v2388 = vunpack.c.l.b16 %v1870
      %v2389 = vunpack.c.l.b16 %v1884
      %v2390 = vunpack.c.l.b16 %v1898
      %v2391 = vunpack.c.l.b16 %v1912
      %v2392 = vunpack.c.l.b16 %v1926
      %v2393 = vunpack.c.l.b16 %v1940
      %v2394 = vpack.c.b16 %v2387, %v2386
      %v2395 = vpack.c.b16 %v2389, %v2388
      %v2396 = vpack.c.b16 %v2391, %v2390
      %v2397 = vpack.c.b16 %v2393, %v2392
      %2398 = vrot.lane.b32.xlu0 %v2394, 8
      %v2399 = vpop.permute.xlu0 %2398
      %2400 = vrot.lane.b32.xlu0 %v2395, 8
      %v2401 = vpop.permute.xlu0 %2400
      %2402 = vrot.lane.b32.xlu0 %v2396, 8
      %v2403 = vpop.permute.xlu0 %2402
      %2404 = vrot.lane.b32.xlu0 %v2397, 8
      %v2405 = vpop.permute.xlu0 %2404
      %v2406 = vunpack.c.l.b16 %v1968
      %v2407 = vunpack.c.l.b16 %v1972
      %v2408 = vunpack.c.l.b16 %v1976
      %v2409 = vunpack.c.l.b16 %v1980
      %v2410 = vunpack.c.l.b16 %v1984
      %v2411 = vunpack.c.l.b16 %v1988
      %v2412 = vunpack.c.l.b16 %v1992
      %v2413 = vunpack.c.l.b16 %v1996
      %v2414 = vpack.c.b16 %v2407, %v2406
      %v2415 = vpack.c.b16 %v2409, %v2408
      %v2416 = vpack.c.b16 %v2411, %v2410
      %v2417 = vpack.c.b16 %v2413, %v2412
      %2418 = vrot.lane.b32.xlu0 %v2414, 16
      %v2419 = vpop.permute.xlu0 %2418
      %2420 = vrot.lane.b32.xlu0 %v2415, 16
      %v2421 = vpop.permute.xlu0 %2420
      %2422 = vrot.lane.b32.xlu0 %v2416, 16
      %v2423 = vpop.permute.xlu0 %2422
      %2424 = vrot.lane.b32.xlu0 %v2417, 16
      %v2425 = vpop.permute.xlu0 %2424
      %v2434 = vunpack.c.l.b16 %v1997
      %v2435 = vunpack.c.l.b16 %v1998
      %v2436 = vunpack.c.l.b16 %v1999
      %v2437 = vunpack.c.l.b16 %v2000
      %v2438 = vunpack.c.l.b16 %v2001
      %v2439 = vunpack.c.l.b16 %v2002
      %v2440 = vunpack.c.l.b16 %v2003
      %v2441 = vunpack.c.l.b16 %v2004
      %v2442 = vpack.c.b16 %v2435, %v2434
      %v2443 = vpack.c.b16 %v2437, %v2436
      %v2444 = vpack.c.b16 %v2439, %v2438
      %v2445 = vpack.c.b16 %v2441, %v2440
      %2446 = vrot.lane.b32.xlu0 %v2442, 24
      %v2447 = vpop.permute.xlu0 %2446
      %2448 = vrot.lane.b32.xlu0 %v2443, 24
      %v2449 = vpop.permute.xlu0 %2448
      %2450 = vrot.lane.b32.xlu0 %v2444, 24
      %v2451 = vpop.permute.xlu0 %2450
      %2452 = vrot.lane.b32.xlu0 %v2445, 24
      %v2453 = vpop.permute.xlu0 %2452
      %v2454 = vunpack.c.l.b16 %v2026
      %v2455 = vunpack.c.l.b16 %v2040
      %v2456 = vunpack.c.l.b16 %v2054
      %v2457 = vunpack.c.l.b16 %v2068
      %v2458 = vunpack.c.l.b16 %v2082
      %v2459 = vunpack.c.l.b16 %v2096
      %v2460 = vunpack.c.l.b16 %v2110
      %v2461 = vunpack.c.l.b16 %v2124
      %v2462 = vpack.c.b16 %v2455, %v2454
      %v2463 = vpack.c.b16 %v2457, %v2456
      %v2464 = vpack.c.b16 %v2459, %v2458
      %v2465 = vpack.c.b16 %v2461, %v2460
      %2466 = vrot.lane.b32.xlu0 %v2462, 32
      %v2467 = vpop.permute.xlu0 %2466
      %2468 = vrot.lane.b32.xlu0 %v2463, 32
      %v2469 = vpop.permute.xlu0 %2468
      %2470 = vrot.lane.b32.xlu0 %v2464, 32
      %v2471 = vpop.permute.xlu0 %2470
      %2472 = vrot.lane.b32.xlu0 %v2465, 32
      %v2473 = vpop.permute.xlu0 %2472
      %v2474 = vunpack.c.l.b16 %v2152
      %v2475 = vunpack.c.l.b16 %v2156
      %v2476 = vunpack.c.l.b16 %v2160
      %v2477 = vunpack.c.l.b16 %v2164
      %v2478 = vunpack.c.l.b16 %v2168
      %v2479 = vunpack.c.l.b16 %v2172
      %v2480 = vunpack.c.l.b16 %v2176
      %v2481 = vunpack.c.l.b16 %v2180
      %v2482 = vpack.c.b16 %v2475, %v2474
      %v2483 = vpack.c.b16 %v2477, %v2476
      %v2484 = vpack.c.b16 %v2479, %v2478
      %v2485 = vpack.c.b16 %v2481, %v2480
      %2486 = vrot.lane.b32.xlu0 %v2482, 40
      %v2487 = vpop.permute.xlu0 %2486
      %2488 = vrot.lane.b32.xlu0 %v2483, 40
      %v2489 = vpop.permute.xlu0 %2488
      %2490 = vrot.lane.b32.xlu0 %v2484, 40
      %v2491 = vpop.permute.xlu0 %2490
      %2492 = vrot.lane.b32.xlu0 %v2485, 40
      %v2493 = vpop.permute.xlu0 %2492
      %v2502 = vunpack.c.l.b16 %v2182
      %v2503 = vunpack.c.l.b16 %v2183
      %v2504 = vunpack.c.l.b16 %v2184
      %v2505 = vunpack.c.l.b16 %v2185
      %v2506 = vunpack.c.l.b16 %v2186
      %v2507 = vunpack.c.l.b16 %v2187
      %v2508 = vunpack.c.l.b16 %v2188
      %v2509 = vunpack.c.l.b16 %v2189
      %v2510 = vpack.c.b16 %v2503, %v2502
      %v2511 = vpack.c.b16 %v2505, %v2504
      %v2512 = vpack.c.b16 %v2507, %v2506
      %v2513 = vpack.c.b16 %v2509, %v2508
      %2514 = vrot.lane.b32.xlu0 %v2510, 48
      %v2515 = vpop.permute.xlu0 %2514
      %2516 = vrot.lane.b32.xlu0 %v2511, 48
      %v2517 = vpop.permute.xlu0 %2516
      %2518 = vrot.lane.b32.xlu0 %v2512, 48
      %v2519 = vpop.permute.xlu0 %2518
      %2520 = vrot.lane.b32.xlu0 %v2513, 48
      %v2521 = vpop.permute.xlu0 %2520
      %v2522 = vunpack.c.l.b16 %v2211
      %v2523 = vunpack.c.l.b16 %v2225
      %v2524 = vunpack.c.l.b16 %v2239
      %v2525 = vunpack.c.l.b16 %v2253
      %v2526 = vunpack.c.l.b16 %v2267
      %v2527 = vunpack.c.l.b16 %v2281
      %v2528 = vunpack.c.l.b16 %v2295
      %v2529 = vunpack.c.l.b16 %v2309
      %v2530 = vpack.c.b16 %v2523, %v2522
      %v2531 = vpack.c.b16 %v2525, %v2524
      %v2532 = vpack.c.b16 %v2527, %v2526
      %v2533 = vpack.c.b16 %v2529, %v2528
      %2534 = vrot.lane.b32.xlu0 %v2530, 56
      %v2535 = vpop.permute.xlu0 %2534
      %2536 = vrot.lane.b32.xlu0 %v2531, 56
      %v2537 = vpop.permute.xlu0 %2536
      %2538 = vrot.lane.b32.xlu0 %v2532, 56
      %v2539 = vpop.permute.xlu0 %2538
      %2540 = vrot.lane.b32.xlu0 %v2533, 56
      %v2541 = vpop.permute.xlu0 %2540
      %v2542 = vunpack.c.l.b16 %v2337
      %v2543 = vunpack.c.l.b16 %v2341
      %v2544 = vunpack.c.l.b16 %v2345
      %v2545 = vunpack.c.l.b16 %v2349
      %v2546 = vunpack.c.l.b16 %v2353
      %v2547 = vunpack.c.l.b16 %v2357
      %v2548 = vunpack.c.l.b16 %v2361
      %v2549 = vunpack.c.l.b16 %v2365
      %v2550 = vpack.c.b16 %v2543, %v2542
      %v2551 = vpack.c.b16 %v2545, %v2544
      %v2552 = vpack.c.b16 %v2547, %v2546
      %v2553 = vpack.c.b16 %v2549, %v2548
      %2554 = vrot.lane.b32.xlu0 %v2550, 64
      %v2555 = vpop.permute.xlu0 %2554
      %2556 = vrot.lane.b32.xlu0 %v2551, 64
      %v2557 = vpop.permute.xlu0 %2556
      %2558 = vrot.lane.b32.xlu0 %v2552, 64
      %v2559 = vpop.permute.xlu0 %2558
      %2560 = vrot.lane.b32.xlu0 %v2553, 64
      %v2561 = vpop.permute.xlu0 %2560
      %v2564 = vsel %vm1408, %v2382, %v2399
      %v2567 = vsel %vm1408, %v2383, %v2401
      %v2570 = vsel %vm1408, %v2384, %v2403
      %v2573 = vsel %vm1408, %v2385, %v2405
      %v2575 = vsel %vm1426, %v2564, %v2419
      %v2577 = vsel %vm1426, %v2567, %v2421
      %v2579 = vsel %vm1426, %v2570, %v2423
      %v2581 = vsel %vm1426, %v2573, %v2425
      %v2583 = vsel %vm1444, %v2575, %v2447
      %v2585 = vsel %vm1444, %v2577, %v2449
      %v2587 = vsel %vm1444, %v2579, %v2451
      %v2589 = vsel %vm1444, %v2581, %v2453
      %v2591 = vsel %vm1462, %v2583, %v2467
      %v2593 = vsel %vm1462, %v2585, %v2469
      %v2595 = vsel %vm1462, %v2587, %v2471
      %v2597 = vsel %vm1462, %v2589, %v2473
      %vm2598 = vcmask 326656
      %v2600 = vsel %vm2598, %v2591, %v2487
      %v2602 = vsel %vm2598, %v2593, %v2489
      %v2604 = vsel %vm2598, %v2595, %v2491
      %v2606 = vsel %vm2598, %v2597, %v2493
      %vm2607 = vcmask 392192
      %v2609 = vsel %vm2607, %v2600, %v2515
      %v2611 = vsel %vm2607, %v2602, %v2517
      %v2613 = vsel %vm2607, %v2604, %v2519
      %v2615 = vsel %vm2607, %v2606, %v2521
      %vm2616 = vcmask 457728
      %v2618 = vsel %vm2616, %v2609, %v2535
      %v2620 = vsel %vm2616, %v2611, %v2537
      %v2622 = vsel %vm2616, %v2613, %v2539
      %v2624 = vsel %vm2616, %v2615, %v2541
      %vm2625 = vcmask 523264
      %v2627 = vsel %vm2625, %v2618, %v2555
      %v2629 = vsel %vm2625, %v2620, %v2557
      %v2631 = vsel %vm2625, %v2622, %v2559
      %v2633 = vsel %vm2625, %v2624, %v2561
      %v2634 = vld [vmem:[%s3] sm:$0xf]
      %v2635 = vld [vmem:[%s3 + $0x4] sm:$0xf]
      %v2636 = vld [vmem:[%s3 + $0x8] sm:$0xf]
      %v2637 = vld [vmem:[%s3 + $0xc] sm:$0xf]
      %v2638 = vld [vmem:[%s3 + $0x10] sm:$0xf]
      %v2639 = vld [vmem:[%s3 + $0x14] sm:$0xf]
      %v2640 = vld [vmem:[%s3 + $0x18] sm:$0xf]
      %v2641 = vld [vmem:[%s3 + $0x1c] sm:$0xf]
      %v2642 = vld [vmem:[%s3 + $0x20] sm:$0xf]
      %v2643 = vld [vmem:[%s4] sm:$0x1]
      %v2645 = vlaneseq
      %v2646 = vshrl.u32 %v2645, 7
      %v2647 = vsub.s32 0, %v2646
      %v2648 = vrot.slane %v2643, %v2647
      %v2659 = vunpack.c.l.b16 %v2634
      %v2660 = vunpack.c.l.b16 %v2635
      %v2661 = vunpack.c.l.b16 %v2636
      %v2662 = vunpack.c.l.b16 %v2637
      %v2663 = vunpack.c.l.b16 %v2638
      %v2664 = vunpack.c.l.b16 %v2639
      %v2665 = vunpack.c.l.b16 %v2640
      %v2666 = vunpack.c.l.b16 %v2641
      %v2667 = vunpack.c.l.b16 %v2642
      %v2668 = vpack.c.b16 %v2660, %v2659
      %v2669 = vpack.c.b16 %v2662, %v2661
      %v2670 = vpack.c.b16 %v2664, %v2663
      %v2671 = vpack.c.b16 %v2666, %v2665
      %v2672 = vpack.c.b16 %v2667, %v2667
      %vm2677 = vcmask 588800
      %v2678 = vsel %vm2677, %v2627, 0
      %v2680 = vsel %vm2677, %v2629, 0
      %v2682 = vsel %vm2677, %v2631, 0
      %v2684 = vsel %vm2677, %v2633, 0
      %vm2686 = vcmask 1043456
      %v2688 = vsel %vm2686, %v2672, 0
      %2690 = vmatprep.subr.bf16.mxu0 0
      %2691 = vmatpush1.bf16.msra.mxu0 %v2668
      %2692 = vmatprep.subr.bf16.mxu0 0
      %2693 = vmatpush1.bf16.msra.mxu0 %v2669
      %2694 = vmatprep.subr.bf16.mxu0 0
      %2695 = vmatpush1.bf16.msra.mxu0 %v2670
      %2696 = vmatprep.subr.bf16.mxu0 0
      %2697 = vmatpush1.bf16.msra.mxu0 %v2671
      %2698 = vmatprep.subr.bf16.mxu0 0
      %2699 = vmatpush1.bf16.msra.mxu0 %v2688
      %2700 = vmatprep.subr.bf16.mxu0 0
      %2701 = vmatpush1.bf16.msra.mxu0 0
      %2702 = vmatprep.subr.bf16.mxu0 0
      %2703 = vmatpush1.bf16.msra.mxu0 0
      %2704 = vmatprep.subr.bf16.mxu0 0
      %2705 = vmatpush1.bf16.msra.mxu0 0
      %2706 = vmatprep.subr.bf16.mxu0 0
      %2707 = vmatpush1.bf16.msra.mxu0 0
      %2708 = vmatprep.subr.bf16.mxu0 0
      %2709 = vmatpush1.bf16.msra.mxu0 0
      %2710 = vmatprep.subr.bf16.mxu0 0
      %2711 = vmatpush1.bf16.msra.mxu0 0
      %2712 = vmatprep.subr.bf16.mxu0 0
      %2713 = vmatpush1.bf16.msra.mxu0 0
      %2714 = vmatprep.subr.bf16.mxu0 0
      %2715 = vmatpush1.bf16.msra.mxu0 0
      %2716 = vmatprep.subr.bf16.mxu0 0
      %2717 = vmatpush1.bf16.msra.mxu0 0
      %2718 = vmatprep.subr.bf16.mxu0 0
      %2719 = vmatpush1.bf16.msra.mxu0 0
      %2720 = vmatprep.subr.bf16.mxu0 0
      %2721 = vmatpush1.bf16.msra.mxu0 0
      %2722 = vmatprep.mubr.bf16.mxu0 0
      %2723 = vmatmul.mubr.bf16.gmra.mrb[0].mxu0 %v2678
      %v2724 = vpop.f32.mrb[0].mxu0
      %v2725 = vadd.f32 %v2648, %v2724
      %v2726 = vpop.f32.mrb[0].mxu0
      %v2727 = vpop.f32.mrb[0].mxu0
      %v2728 = vadd.f32 %v2648, %v2727
      %v2729 = vpop.f32.mrb[0].mxu0
      %2730 = vmatprep.mubr.bf16.mxu0 0
      %2731 = vmatmul.mubr.bf16.gmra.mrb[0].mxu0 %v2680
      %v2732 = vpop.f32.mrb[0].mxu0
      %v2733 = vadd.f32 %v2648, %v2732
      %v2734 = vpop.f32.mrb[0].mxu0
      %v2735 = vpop.f32.mrb[0].mxu0
      %v2736 = vadd.f32 %v2648, %v2735
      %v2737 = vpop.f32.mrb[0].mxu0
      %2738 = vmatprep.mubr.bf16.mxu0 0
      %2739 = vmatmul.mubr.bf16.gmra.mrb[0].mxu0 %v2682
      %v2740 = vpop.f32.mrb[0].mxu0
      %v2741 = vadd.f32 %v2648, %v2740
      %v2742 = vpop.f32.mrb[0].mxu0
      %v2743 = vpop.f32.mrb[0].mxu0
      %v2744 = vadd.f32 %v2648, %v2743
      %v2745 = vpop.f32.mrb[0].mxu0
      %2746 = vmatprep.mubr.bf16.mxu0 0
      %2747 = vmatmul.mubr.bf16.gmra.mrb[0].mxu0 %v2684
      %v2748 = vpop.f32.mrb[0].mxu0
      %v2749 = vadd.f32 %v2648, %v2748
      %v2750 = vpop.f32.mrb[0].mxu0
      %v2751 = vpop.f32.mrb[0].mxu0
      %v2752 = vadd.f32 %v2648, %v2751
      %v2753 = vpop.f32.mrb[0].mxu0
      %2754 = vdwg.mxu0
      %v2755 = vadd.f32 %v1546, %v1616
      %v2756 = vadd.f32 %v1549, %v1617
      %v2757 = vadd.f32 %v1554, %v1618
      %v2758 = vadd.f32 %v1557, %v1619
      %v2759 = vadd.f32 %v1562, %v1620
      %v2760 = vadd.f32 %v1565, %v1621
      %v2761 = vadd.f32 %v1570, %v1622
      %v2762 = vadd.f32 %v1573, %v1623
      %2771 = vrot.lane.b32.xlu0 %v2725, 8
      %v2772 = vpop.permute.xlu0 %2771
      %2773 = vrot.lane.b32.xlu0 %v2728, 8
      %v2774 = vpop.permute.xlu0 %2773
      %2775 = vrot.lane.b32.xlu0 %v2733, 8
      %v2776 = vpop.permute.xlu0 %2775
      %2777 = vrot.lane.b32.xlu0 %v2736, 8
      %v2778 = vpop.permute.xlu0 %2777
      %2779 = vrot.lane.b32.xlu0 %v2741, 8
      %v2780 = vpop.permute.xlu0 %2779
      %2781 = vrot.lane.b32.xlu0 %v2744, 8
      %v2782 = vpop.permute.xlu0 %2781
      %2783 = vrot.lane.b32.xlu0 %v2749, 8
      %v2784 = vpop.permute.xlu0 %2783
      %2785 = vrot.lane.b32.xlu0 %v2752, 8
      %v2786 = vpop.permute.xlu0 %2785
      %v2795 = vadd.f32 %v2755, %v2772
      %v2796 = vadd.f32 %v2756, %v2774
      %v2797 = vadd.f32 %v2757, %v2776
      %v2798 = vadd.f32 %v2758, %v2778
      %v2799 = vadd.f32 %v2759, %v2780
      %v2800 = vadd.f32 %v2760, %v2782
      %v2801 = vadd.f32 %v2761, %v2784
      %v2802 = vadd.f32 %v2762, %v2786
      %v2803 = vmax.f32 %v2795, 0.0
      %v2804 = vmax.f32 %v2796, 0.0
      %v2805 = vmax.f32 %v2797, 0.0
      %v2806 = vmax.f32 %v2798, 0.0
      %v2807 = vmax.f32 %v2799, 0.0
      %v2808 = vmax.f32 %v2800, 0.0
      %v2809 = vmax.f32 %v2801, 0.0
      %v2810 = vmax.f32 %v2802, 0.0
      %2819 = vrot.lane.b32.xlu0 %v2803, 120
      %v2820 = vpop.permute.xlu0 %2819
      %2821 = vrot.lane.b32.xlu0 %v2804, 120
      %v2822 = vpop.permute.xlu0 %2821
      %2823 = vrot.lane.b32.xlu0 %v2805, 120
      %v2824 = vpop.permute.xlu0 %2823
      %2825 = vrot.lane.b32.xlu0 %v2806, 120
      %v2826 = vpop.permute.xlu0 %2825
      %2827 = vrot.lane.b32.xlu0 %v2807, 120
      %v2828 = vpop.permute.xlu0 %2827
      %2829 = vrot.lane.b32.xlu0 %v2808, 120
      %v2830 = vpop.permute.xlu0 %2829
      %2831 = vrot.lane.b32.xlu0 %v2809, 120
      %v2832 = vpop.permute.xlu0 %2831
      %2833 = vrot.lane.b32.xlu0 %v2810, 120
      %v2834 = vpop.permute.xlu0 %2833
      %2843 = vst.msk [vmem:[%s224] sm:$0xff] %vm1408, %v2820
      %2844 = vst.msk [vmem:[%s224 + $0x8] sm:$0xff] %vm1408, %v2822
      %2845 = vst.msk [vmem:[%s224 + $0x10] sm:$0xff] %vm1408, %v2824
      %2846 = vst.msk [vmem:[%s224 + $0x18] sm:$0xff] %vm1408, %v2826
      %2847 = vst.msk [vmem:[%s224 + $0x20] sm:$0xff] %vm1408, %v2828
      %2848 = vst.msk [vmem:[%s224 + $0x28] sm:$0xff] %vm1408, %v2830
      %2849 = vst.msk [vmem:[%s224 + $0x30] sm:$0xff] %vm1408, %v2832
      %2850 = vst.msk [vmem:[%s224 + $0x38] sm:$0xff] %vm1408, %v2834
      %p2851 = scmp.lt.s32.totalorder %s16, 1
      %s2852 = scalar_select %p2851, %s16, 1
      %s2853 = smul.addr %s2852, 8
      %s2854 = smul.addr %s2853, 8
      %s2855 = scalar_lea.vmem %s5, %s2854
      // Predicated region
      $region45: #{tpu_custom_call.1} parent=39 // pred_check
        %p2856 = pneg %p144
      $region46: #{tpu_custom_call.1} parent=39 // pred_check_branch
        %2858 = sbr.rel (%p2856) target = $region48
      $region47: #{tpu_custom_call.1} parent=39 // pred_region
        _
      $region48: #{tpu_custom_call.1} parent=39 // pred_fallthru
        _
    $region40: #{tpu_custom_call.1} parent=5 // pred_fallthru
      _
    %p2859 = scmp.le.s32.totalorder 2, %s11
    // Predicated region
    $region49: #{tpu_custom_call.1} parent=5 // pred_check
      %p2860 = pneg %p2859
    $region50: #{tpu_custom_call.1} parent=5 // pred_check_branch
      %2862 = sbr.rel (%p2860) target = $region52
    $region51: #{tpu_custom_call.1} parent=5 // pred_region
      %s2863 = ssub.s32 %s11, 2
      // Predicated region
      $region53: #{tpu_custom_call.1} parent=51 // pred_check
        %p2864 = pneg %p150
      $region54: #{tpu_custom_call.1} parent=51 // pred_check_branch
        %2866 = sbr.rel (%p2864) target = $region56
      $region55: #{tpu_custom_call.1} parent=51 // pred_region
        %p2867 = scmp.lt.s32.totalorder %s17, 1
        %s2868 = scalar_select %p2867, %s17, 1
        %s2869 = smul.addr %s2868, 8
        %s2870 = smul.addr %s2869, 8
        %s2871 = scalar_lea.vmem %s5, %s2870
      $region56: #{tpu_custom_call.1} parent=51 // pred_fallthru
        _
    $region52: #{tpu_custom_call.1} parent=5 // pred_fallthru
      _
  $region6: #{tpu_custom_call.1} parent=0 // loop_footer
    %s15 = sadd.s32 1, %s11
  $region7: #{tpu_custom_call.1} parent=0 // loop_footer_branch
    %10 = sbr.rel target = $region3
  $region8: #{tpu_custom_call.1} parent=0 // loop_exit
    _

</llo_original>
